<compile_context>
chip_gen: v5e
topology: v5e:2x2
jax: 0.10.0
libtpu: 0.0.40
codegen_flags: <defaults>
</compile_context>

<pallas_src>
import math
from functools import partial

import jax
import jax.numpy as jnp
from jax.experimental import pallas as pl
from jax.experimental.pallas import tpu as pltpu


def _round_up(x, m):
    return (x + m - 1) // m * m


# --------------------------------------------------------------------------- #
# In-kernel GELU (tanh form): transcendental on the EUP, few VALU ops.
# --------------------------------------------------------------------------- #
_GELU_C1 = 0.7978845608028654            # sqrt(2/pi)
_GELU_C2 = _GELU_C1 * 0.044715


def _gelu_tanh(x):
    x = x.astype(jnp.float32)
    inner = x * (jnp.float32(_GELU_C1) + jnp.float32(_GELU_C2) * (x * x))
    return jnp.float32(0.5) * x * (jnp.float32(1.0) + jnp.tanh(inner))


# --------------------------------------------------------------------------- #
# Kernel 1: conv1-as-GEMM (pixel-pair packed, K=24, N=128) + GELU
# --------------------------------------------------------------------------- #
def _conv1_gelu_kernel(p_ref, w_ref, o_ref):
    acc = jnp.dot(p_ref[...], w_ref[...], preferred_element_type=jnp.float32)
    o_ref[...] = _gelu_tanh(acc).astype(o_ref.dtype)


def _conv1_gelu(p1, w1_gemm, tile_m):
    m_pad, k = p1.shape
    n = w1_gemm.shape[1]
    return pl.pallas_call(
        _conv1_gelu_kernel,
        out_shape=jax.ShapeDtypeStruct((m_pad, n), jnp.bfloat16),
        grid_spec=pltpu.PrefetchScalarGridSpec(
            num_scalar_prefetch=0,
            grid=(m_pad // tile_m,),
            in_specs=[
                pl.BlockSpec((tile_m, k), lambda i: (i, 0)),
                pl.BlockSpec((k, n), lambda i: (0, 0)),       # weight resident in VMEM
            ],
            out_specs=pl.BlockSpec((tile_m, n), lambda i: (i, 0)),
        ),
        compiler_params=pltpu.CompilerParams(
            dimension_semantics=("parallel",),
            vmem_limit_bytes=32 * 1024 * 1024,
        ),
    )(p1, w1_gemm)


# --------------------------------------------------------------------------- #
# Kernel 2: conv2-as-GEMM (spatial-stacked M) + GELU + projector, fused
# --------------------------------------------------------------------------- #
_S_CHUNK = 7  # spatial positions (of 49) processed per inner ("arbitrary") grid step


def _conv2_gelu_proj_kernel(p2_ref, w2_ref, wp_ref, bias_ref, o_ref, acc_ref):
    s = pl.program_id(1)

    @pl.when(s == 0)
    def _init():
        acc_ref[...] = jnp.zeros_like(acc_ref)

    sc, tb, k = p2_ref.shape
    # Stack the chunk's 7 spatial positions into GEMM M: (7,TB,1024)->(7*TB,1024).
    # Leading-axis merge (TB is a multiple of 8) => no relayout, free.
    patches = p2_ref[...].reshape(sc * tb, k)
    h = jnp.dot(patches, w2_ref[...], preferred_element_type=jnp.float32)
    h = _gelu_tanh(h).astype(jnp.bfloat16)                      # (7*TB, 128)

    # Projector partial sums: one 8-aligned (TB,128) row block per spatial pos,
    # accumulated directly into the f32 VMEM scratch (vld/vst slots have slack).
    for j in range(sc):
        acc_ref[...] += jnp.dot(h[j * tb:(j + 1) * tb, :], wp_ref[j],
                                preferred_element_type=jnp.float32)

    @pl.when(s == pl.num_programs(1) - 1)
    def _finalize():
        o_ref[...] = acc_ref[...] + bias_ref[...]


def _conv2_gelu_proj(p2, w2_gemm, wp_gemm, bias_pad, tile_b):
    num_s, bp_rows, k = p2.shape                 # (49, B_pad, 1024)
    n_pad = wp_gemm.shape[-1]
    grid = (bp_rows // tile_b, num_s // _S_CHUNK)
    return pl.pallas_call(
        _conv2_gelu_proj_kernel,
        out_shape=jax.ShapeDtypeStruct((bp_rows, n_pad), jnp.float32),
        grid_spec=pltpu.PrefetchScalarGridSpec(
            num_scalar_prefetch=0,
            grid=grid,
            in_specs=[
                pl.BlockSpec((_S_CHUNK, tile_b, k), lambda t, s: (s, t, 0)),
                pl.BlockSpec((k, 128), lambda t, s: (0, 0)),                 # resident conv2 weight
                pl.BlockSpec((_S_CHUNK, 128, n_pad), lambda t, s: (s, 0, 0)),  # projector weight tiled over s
                pl.BlockSpec((1, n_pad), lambda t, s: (0, 0)),               # resident bias
            ],
            out_specs=pl.BlockSpec((tile_b, n_pad), lambda t, s: (t, 0)),
            scratch_shapes=[pltpu.VMEM((tile_b, n_pad), jnp.float32)],
        ),
        compiler_params=pltpu.CompilerParams(
            dimension_semantics=("parallel", "arbitrary"),
            vmem_limit_bytes=32 * 1024 * 1024,
        ),
    )(p2, w2_gemm, wp_gemm, bias_pad)


def _pick_tile_b(b):
    """Batch-tile rows for kernel 2.

    Prefers >=2 batch tiles (both v7x TensorCores get work on the 'parallel'
    axis) and 256 rows per tile when the batch is large enough, so the
    spatial-stacked conv2 GEMM has M = 7*TB >= 1792 for the 256-wide MXU.
    """
    b8 = _round_up(b, 8)
    if b8 >= 512:
        return 256
    if b8 >= 256:
        return 128
    if b8 >= 32:
        return _round_up(b8 // 2, 8)
    return b8


# --------------------------------------------------------------------------- #
# Forward pass (XLA glue for im2col; all GEMM/GELU work inside Pallas kernels)
# --------------------------------------------------------------------------- #
@partial(jax.jit, static_argnums=(4,))
def _forward(w1_gemm, w2_gemm, wp_gemm, bias_pad, common_dim, x):
    b = x.shape[0]

    # ---- conv1 patches, pixel-pair packed: rows = (b, oh, ow//2), K = 4*6 ----
    xp = jnp.pad(x[:, 0], ((0, 0), (1, 1), (1, 1)))                  # (B, 30, 30)
    cols = [xp[:, kh:kh + 27:2, kw:kw + 25:4]
            for kh in range(4) for kw in range(6)]                   # each (B, 14, 7)
    p1 = jnp.stack(cols, axis=-1).reshape(b * 98, 24).astype(jnp.bfloat16)

    m1 = b * 98
    tile_m = min(4096, _round_up(m1, 8))   # large tiles: conv1 is step-overhead bound
    m1_pad = _round_up(m1, tile_m)
    p1 = jnp.pad(p1, ((0, m1_pad - m1), (0, 0)))

    h1 = _conv1_gelu(p1, w1_gemm, tile_m)                            # (m1_pad, 128) bf16
    h1 = h1[:m1].reshape(b, 14, 14, 64)                              # NHWC, bf16

    # ---- conv2 im2col, spatial-major: (49, B_pad, 1024) ----------------------
    h1p = jnp.pad(h1, ((0, 0), (1, 1), (1, 1), (0, 0)))              # (B, 16, 16, 64)
    taps = [h1p[:, kh:kh + 13:2, kw:kw + 13:2, :]
            for kh in range(4) for kw in range(4)]                   # each (B, 7, 7, 64)
    p2 = jnp.stack(taps, axis=3).reshape(b, 49, 1024)
    p2 = jnp.transpose(p2, (1, 0, 2))                                # (49, B, 1024)

    tile_b = _pick_tile_b(b)
    bp_rows = _round_up(b, tile_b)
    p2 = jnp.pad(p2, ((0, 0), (0, bp_rows - b), (0, 0)))

    out = _conv2_gelu_proj(p2, w2_gemm, wp_gemm, bias_pad, tile_b)   # (bp, n_pad) f32
    return out[:b, :common_dim]


# --------------------------------------------------------------------------- #
# Module
# --------------------------------------------------------------------------- #
class MHDImageProcessorPallas:
    """Pallas TPU port of MHDImageProcessor.

    forward(x): x is NCHW (B, 1, 28, 28) float32 -> (B, common_dim) float32.
    Conv layers are bias-free (matching the PyTorch spec); the projector has a bias.
    """

    def __init__(self, common_dim, key):
        self.common_dim = common_dim
        k1, k2, k3, k4 = jax.random.split(key, 4)
        # Reference parameters in PyTorch layouts (f32), fan-in scaled.
        self.w1 = jax.random.normal(k1, (64, 1, 4, 4), jnp.float32) / math.sqrt(1 * 4 * 4)
        self.w2 = jax.random.normal(k2, (128, 64, 4, 4), jnp.float32) / math.sqrt(64 * 4 * 4)
        self.wp = jax.random.normal(k3, (common_dim, 128 * 7 * 7), jnp.float32) / math.sqrt(128 * 7 * 7)
        self.bp = jax.random.normal(k4, (common_dim,), jnp.float32) * 0.01
        self._prepare_gemm_weights()

    def _prepare_gemm_weights(self):
        # conv1, pixel-pair packed: (24, 128).  Output lane 64*s + c holds channel c
        # of output pixel (oh, 2t+s); the K axis is the shared 4x6 input patch.
        w1_khkwc = jnp.transpose(self.w1[:, 0], (1, 2, 0))            # (kh, kw, c)
        w1p = jnp.zeros((4, 6, 2, 64), jnp.float32)
        for s in range(2):
            w1p = w1p.at[:, 2 * s:2 * s + 4, s, :].set(w1_khkwc)
        self.w1_gemm = w1p.reshape(24, 128).astype(jnp.bfloat16)

        # conv2: (cout, cin, kh, kw) -> (kh, kw, cin, cout) -> (1024, 128)
        self.w2_gemm = (jnp.transpose(self.w2, (2, 3, 1, 0))
                        .reshape(16 * 64, 128).astype(jnp.bfloat16))

        # projector: pre-permute to (spatial, channel, out) to match the fused
        # kernel's accumulation order (no per-call NCHW activation transpose);
        # pad the output dim to a lane-dense multiple of 128.
        n_pad = _round_up(self.common_dim, 128)
        wp_p = jnp.transpose(self.wp.reshape(self.common_dim, 128, 49), (2, 1, 0))
        wp_p = jnp.pad(wp_p, ((0, 0), (0, 0), (0, n_pad - self.common_dim)))
        self.wp_gemm = wp_p.astype(jnp.bfloat16)
        self.bias_pad = jnp.pad(self.bp, (0, n_pad - self.common_dim)).reshape(1, n_pad)

    def set_common_dim(self, common_dim, key=None):
        key = jax.random.PRNGKey(1) if key is None else key
        k3, k4 = jax.random.split(key)
        self.common_dim = common_dim
        self.wp = jax.random.normal(k3, (common_dim, 128 * 7 * 7), jnp.float32) / math.sqrt(128 * 7 * 7)
        self.bp = jax.random.normal(k4, (common_dim,), jnp.float32) * 0.01
        self._prepare_gemm_weights()

    def __call__(self, x):
        return _forward(self.w1_gemm, self.w2_gemm, self.wp_gemm, self.bias_pad,
                        self.common_dim, x)


# --------------------------------------------------------------------------- #
# Pure-JAX f32 reference (matches the PyTorch module: exact GELU)
# --------------------------------------------------------------------------- #
def _reference_forward(x, w1, w2, wp, bp):
    dn = ("NCHW", "OIHW", "NCHW")
    hp = jax.lax.Precision.HIGHEST
    h = jax.lax.conv_general_dilated(x, w1, (2, 2), ((1, 1), (1, 1)),
                                     dimension_numbers=dn, precision=hp)
    h = jax.nn.gelu(h, approximate=False)
    h = jax.lax.conv_general_dilated(h, w2, (2, 2), ((1, 1), (1, 1)),
                                     dimension_numbers=dn, precision=hp)
    h = jax.nn.gelu(h, approximate=False)
    h = h.reshape(h.shape[0], -1)
    return jnp.dot(h, wp.T, precision=hp) + bp


if __name__ == "__main__":
    key = jax.random.PRNGKey(0)
    k_x, k_params = jax.random.split(key)
    # 28x28 input is implied by the module (projector expects 128 * 7 * 7).
    x = jax.random.normal(k_x, (2, 1, 28, 28), jnp.float32)

    model = MHDImageProcessorPallas(common_dim=64, key=k_params)
    out = jax.block_until_ready(model(x))

    assert out.shape == (2, 64) and out.dtype == jnp.float32
    assert bool(jnp.all(jnp.isfinite(out)))

    # Numerical check vs. f32 reference (bf16 MXU inputs + tanh GELU => ~1e-2 tol).
    ref = _reference_forward(x, model.w1, model.w2, model.wp, model.bp)
    max_err = float(jnp.max(jnp.abs(out - ref)))
    assert bool(jnp.allclose(out, ref, rtol=5e-2, atol=5e-2)), max_err

    print("KERNEL_OK")
</pallas_src>

<mosaic_0001>
module attributes {stable_mosaic.version = 11 : i64} {
  func.func @_conv1_gelu_kernel(%arg0: i32, %arg1: memref<200x24xbf16, #tpu.memory_space<vmem>>, %arg2: memref<24x128xbf16, #tpu.memory_space<vmem>>, %arg3: memref<200x128xbf16, #tpu.memory_space<vmem>>) attributes {dimension_semantics = [#tpu.dimension_semantics<parallel>], iteration_bounds = array<i64: 1>, scalar_prefetch = 0 : i64, scratch_operands = 0 : i64, tpu.core_type = #tpu.core_type<tc>, window_params = [{transform_indices = @transform_0, window_bounds = array<i64: 200, 24>}, {pipeline_mode = #tpu.pipeline_mode<synchronous>, transform_indices = @transform_1, window_bounds = array<i64: 24, 128>}, {transform_indices = @transform_2, window_bounds = array<i64: 200, 128>}]} {
    %c0 = arith.constant 0 : index
    %c0_0 = arith.constant 0 : index
    %0 = vector.load %arg1[%c0, %c0_0] : memref<200x24xbf16, #tpu.memory_space<vmem>>, vector<200x24xbf16>
    %c0_1 = arith.constant 0 : index
    %c0_2 = arith.constant 0 : index
    %1 = vector.load %arg2[%c0_1, %c0_2] : memref<24x128xbf16, #tpu.memory_space<vmem>>, vector<24x128xbf16>
    %cst = arith.constant dense<0.000000e+00> : vector<200x128xf32>
    %2 = tpu.matmul %0, %1, %cst {dimension_numbers = #tpu.dot_dimension_numbers<[1], [0], [0], [1], [0, 0, 1, 1], [], []>} : vector<200x24xbf16>, vector<24x128xbf16>, vector<200x128xf32> -> vector<200x128xf32>
    %3 = arith.mulf %2, %2 : vector<200x128xf32>
    %cst_3 = arith.constant 0.0356774069 : f32
    %4 = vector.broadcast %cst_3 : f32 to vector<200x128xf32>
    %5 = arith.mulf %4, %3 : vector<200x128xf32>
    %cst_4 = arith.constant 0.797884583 : f32
    %6 = vector.broadcast %cst_4 : f32 to vector<200x128xf32>
    %7 = arith.addf %6, %5 : vector<200x128xf32>
    %8 = arith.mulf %2, %7 : vector<200x128xf32>
    %cst_5 = arith.constant 5.000000e-01 : f32
    %9 = vector.broadcast %cst_5 : f32 to vector<200x128xf32>
    %10 = arith.mulf %9, %2 : vector<200x128xf32>
    %11 = math.tanh %8 : vector<200x128xf32>
    %cst_6 = arith.constant 1.000000e+00 : f32
    %12 = vector.broadcast %cst_6 : f32 to vector<200x128xf32>
    %13 = arith.addf %12, %11 : vector<200x128xf32>
    %14 = arith.mulf %10, %13 : vector<200x128xf32>
    %15 = arith.truncf %14 : vector<200x128xf32> to vector<200x128xbf16>
    %c0_7 = arith.constant 0 : index
    %c0_8 = arith.constant 0 : index
    %16 = vector.load %arg3[%c0_7, %c0_8] : memref<200x128xbf16, #tpu.memory_space<vmem>>, vector<200x128xbf16>
    tpu.vector_store %arg3[%c0_7, %c0_8], %15 {strides = array<i32>} : memref<200x128xbf16, #tpu.memory_space<vmem>>, vector<200x128xbf16>,
    return
  }
  func.func @transform_0(%arg0: i32) -> (i32, i32) {
    %c0_i32 = arith.constant 0 : i32
    %c0_i32_0 = arith.constant 0 : i32
    return %arg0, %c0_i32 : i32, i32
  }
  func.func @transform_1(%arg0: i32) -> (i32, i32) {
    %c0_i32 = arith.constant 0 : i32
    %c0_i32_0 = arith.constant 0 : i32
    %c0_i32_1 = arith.constant 0 : i32
    return %c0_i32, %c0_i32_0 : i32, i32
  }
  func.func @transform_2(%arg0: i32) -> (i32, i32) {
    %c0_i32 = arith.constant 0 : i32
    %c0_i32_0 = arith.constant 0 : i32
    return %arg0, %c0_i32 : i32, i32
  }
}

module attributes {stable_mosaic.version = 11 : i64} {
  func.func @_conv2_gelu_proj_kernel(%arg0: i32, %arg1: i32, %arg2: memref<7x8x1024xbf16, #tpu.memory_space<vmem>>, %arg3: memref<1024x128xbf16, #tpu.memory_space<vmem>>, %arg4: memref<7x128x128xbf16, #tpu.memory_space<vmem>>, %arg5: memref<1x128xf32, #tpu.memory_space<vmem>>, %arg6: memref<8x128xf32, #tpu.memory_space<vmem>>, %arg7: memref<8x128xf32, #tpu.memory_space<vmem>>) attributes {dimension_semantics = [#tpu.dimension_semantics<parallel>, #tpu.dimension_semantics<arbitrary>], iteration_bounds = array<i64: 1, 7>, scalar_prefetch = 0 : i64, scratch_operands = 1 : i64, tpu.core_type = #tpu.core_type<tc>, window_params = [{transform_indices = @transform_0, window_bounds = array<i64: 7, 8, 1024>}, {pipeline_mode = #tpu.pipeline_mode<synchronous>, transform_indices = @transform_1, window_bounds = array<i64: 1024, 128>}, {transform_indices = @transform_2, window_bounds = array<i64: 7, 128, 128>}, {pipeline_mode = #tpu.pipeline_mode<synchronous>, transform_indices = @transform_3, window_bounds = array<i64: 1, 128>}, {transform_indices = @transform_4, window_bounds = array<i64: 8, 128>}]} {
    %c0_i32 = arith.constant 0 : i32
    %0 = arith.cmpi eq, %arg1, %c0_i32 : i32
    %1 = arith.extui %0 : i1 to i32
    %c0_i32_0 = arith.constant 0 : i32
    %2 = arith.cmpi ne, %1, %c0_i32_0 : i32
    scf.if %2 {
      %cst_60 = arith.constant 0.000000e+00 : f32
      %72 = vector.broadcast %cst_60 : f32 to vector<8x128xf32>
      %c0_61 = arith.constant 0 : index
      %c0_62 = arith.constant 0 : index
      %73 = vector.load %arg7[%c0_61, %c0_62] : memref<8x128xf32, #tpu.memory_space<vmem>>, vector<8x128xf32>
      tpu.vector_store %arg7[%c0_61, %c0_62], %72 {strides = array<i32>} : memref<8x128xf32, #tpu.memory_space<vmem>>, vector<8x128xf32>,
    } else {
    }
    %c0 = arith.constant 0 : index
    %c0_1 = arith.constant 0 : index
    %c0_2 = arith.constant 0 : index
    %3 = vector.load %arg2[%c0, %c0_1, %c0_2] : memref<7x8x1024xbf16, #tpu.memory_space<vmem>>, vector<7x8x1024xbf16>
    %4 = vector.shape_cast %3 : vector<7x8x1024xbf16> to vector<56x1024xbf16>
    %c0_3 = arith.constant 0 : index
    %c0_4 = arith.constant 0 : index
    %5 = vector.load %arg3[%c0_3, %c0_4] : memref<1024x128xbf16, #tpu.memory_space<vmem>>, vector<1024x128xbf16>
    %cst = arith.constant dense<0.000000e+00> : vector<56x128xf32>
    %6 = tpu.matmul %4, %5, %cst {dimension_numbers = #tpu.dot_dimension_numbers<[1], [0], [0], [1], [0, 0, 1, 1], [], []>} : vector<56x1024xbf16>, vector<1024x128xbf16>, vector<56x128xf32> -> vector<56x128xf32>
    %7 = arith.mulf %6, %6 : vector<56x128xf32>
    %cst_5 = arith.constant 0.0356774069 : f32
    %8 = vector.broadcast %cst_5 : f32 to vector<56x128xf32>
    %9 = arith.mulf %8, %7 : vector<56x128xf32>
    %cst_6 = arith.constant 0.797884583 : f32
    %10 = vector.broadcast %cst_6 : f32 to vector<56x128xf32>
    %11 = arith.addf %10, %9 : vector<56x128xf32>
    %12 = arith.mulf %6, %11 : vector<56x128xf32>
    %cst_7 = arith.constant 5.000000e-01 : f32
    %13 = vector.broadcast %cst_7 : f32 to vector<56x128xf32>
    %14 = arith.mulf %13, %6 : vector<56x128xf32>
    %15 = math.tanh %12 : vector<56x128xf32>
    %cst_8 = arith.constant 1.000000e+00 : f32
    %16 = vector.broadcast %cst_8 : f32 to vector<56x128xf32>
    %17 = arith.addf %16, %15 : vector<56x128xf32>
    %18 = arith.mulf %14, %17 : vector<56x128xf32>
    %19 = arith.truncf %18 : vector<56x128xf32> to vector<56x128xbf16>
    %c0_9 = arith.constant 0 : index
    %c0_10 = arith.constant 0 : index
    %20 = vector.load %arg7[%c0_9, %c0_10] : memref<8x128xf32, #tpu.memory_space<vmem>>, vector<8x128xf32>
    %21 = vector.extract_strided_slice %19 {offsets = [0, 0], sizes = [8, 128], strides = [1, 1]} : vector<56x128xbf16> to vector<8x128xbf16>
    %c0_11 = arith.constant 0 : index
    %c0_12 = arith.constant 0 : index
    %c0_13 = arith.constant 0 : index
    %22 = vector.load %arg4[%c0_11, %c0_12, %c0_13] : memref<7x128x128xbf16, #tpu.memory_space<vmem>>, vector<1x128x128xbf16>
    %23 = vector.shape_cast %22 : vector<1x128x128xbf16> to vector<128x128xbf16>
    %cst_14 = arith.constant dense<0.000000e+00> : vector<8x128xf32>
    %24 = tpu.matmul %21, %23, %cst_14 {dimension_numbers = #tpu.dot_dimension_numbers<[1], [0], [0], [1], [0, 0, 1, 1], [], []>} : vector<8x128xbf16>, vector<128x128xbf16>, vector<8x128xf32> -> vector<8x128xf32>
    %25 = arith.addf %20, %24 : vector<8x128xf32>
    %c0_15 = arith.constant 0 : index
    %c0_16 = arith.constant 0 : index
    %26 = vector.load %arg7[%c0_15, %c0_16] : memref<8x128xf32, #tpu.memory_space<vmem>>, vector<8x128xf32>
    tpu.vector_store %arg7[%c0_15, %c0_16], %25 {strides = array<i32>} : memref<8x128xf32, #tpu.memory_space<vmem>>, vector<8x128xf32>,
    %c0_17 = arith.constant 0 : index
    %c0_18 = arith.constant 0 : index
    %27 = vector.load %arg7[%c0_17, %c0_18] : memref<8x128xf32, #tpu.memory_space<vmem>>, vector<8x128xf32>
    %28 = vector.extract_strided_slice %19 {offsets = [8, 0], sizes = [8, 128], strides = [1, 1]} : vector<56x128xbf16> to vector<8x128xbf16>
    %c1 = arith.constant 1 : index
    %c0_19 = arith.constant 0 : index
    %c0_20 = arith.constant 0 : index
    %29 = vector.load %arg4[%c1, %c0_19, %c0_20] : memref<7x128x128xbf16, #tpu.memory_space<vmem>>, vector<1x128x128xbf16>
    %30 = vector.shape_cast %29 : vector<1x128x128xbf16> to vector<128x128xbf16>
    %cst_21 = arith.constant dense<0.000000e+00> : vector<8x128xf32>
    %31 = tpu.matmul %28, %30, %cst_21 {dimension_numbers = #tpu.dot_dimension_numbers<[1], [0], [0], [1], [0, 0, 1, 1], [], []>} : vector<8x128xbf16>, vector<128x128xbf16>, vector<8x128xf32> -> vector<8x128xf32>
    %32 = arith.addf %27, %31 : vector<8x128xf32>
    %c0_22 = arith.constant 0 : index
    %c0_23 = arith.constant 0 : index
    %33 = vector.load %arg7[%c0_22, %c0_23] : memref<8x128xf32, #tpu.memory_space<vmem>>, vector<8x128xf32>
    tpu.vector_store %arg7[%c0_22, %c0_23], %32 {strides = array<i32>} : memref<8x128xf32, #tpu.memory_space<vmem>>, vector<8x128xf32>,
    %c0_24 = arith.constant 0 : index
    %c0_25 = arith.constant 0 : index
    %34 = vector.load %arg7[%c0_24, %c0_25] : memref<8x128xf32, #tpu.memory_space<vmem>>, vector<8x128xf32>
    %35 = vector.extract_strided_slice %19 {offsets = [16, 0], sizes = [8, 128], strides = [1, 1]} : vector<56x128xbf16> to vector<8x128xbf16>
    %c2 = arith.constant 2 : index
    %c0_26 = arith.constant 0 : index
    %c0_27 = arith.constant 0 : index
    %36 = vector.load %arg4[%c2, %c0_26, %c0_27] : memref<7x128x128xbf16, #tpu.memory_space<vmem>>, vector<1x128x128xbf16>
    %37 = vector.shape_cast %36 : vector<1x128x128xbf16> to vector<128x128xbf16>
    %cst_28 = arith.constant dense<0.000000e+00> : vector<8x128xf32>
    %38 = tpu.matmul %35, %37, %cst_28 {dimension_numbers = #tpu.dot_dimension_numbers<[1], [0], [0], [1], [0, 0, 1, 1], [], []>} : vector<8x128xbf16>, vector<128x128xbf16>, vector<8x128xf32> -> vector<8x128xf32>
    %39 = arith.addf %34, %38 : vector<8x128xf32>
    %c0_29 = arith.constant 0 : index
    %c0_30 = arith.constant 0 : index
    %40 = vector.load %arg7[%c0_29, %c0_30] : memref<8x128xf32, #tpu.memory_space<vmem>>, vector<8x128xf32>
    tpu.vector_store %arg7[%c0_29, %c0_30], %39 {strides = array<i32>} : memref<8x128xf32, #tpu.memory_space<vmem>>, vector<8x128xf32>,
    %c0_31 = arith.constant 0 : index
    %c0_32 = arith.constant 0 : index
    %41 = vector.load %arg7[%c0_31, %c0_32] : memref<8x128xf32, #tpu.memory_space<vmem>>, vector<8x128xf32>
    %42 = vector.extract_strided_slice %19 {offsets = [24, 0], sizes = [8, 128], strides = [1, 1]} : vector<56x128xbf16> to vector<8x128xbf16>
    %c3 = arith.constant 3 : index
    %c0_33 = arith.constant 0 : index
    %c0_34 = arith.constant 0 : index
    %43 = vector.load %arg4[%c3, %c0_33, %c0_34] : memref<7x128x128xbf16, #tpu.memory_space<vmem>>, vector<1x128x128xbf16>
    %44 = vector.shape_cast %43 : vector<1x128x128xbf16> to vector<128x128xbf16>
    %cst_35 = arith.constant dense<0.000000e+00> : vector<8x128xf32>
    %45 = tpu.matmul %42, %44, %cst_35 {dimension_numbers = #tpu.dot_dimension_numbers<[1], [0], [0], [1], [0, 0, 1, 1], [], []>} : vector<8x128xbf16>, vector<128x128xbf16>, vector<8x128xf32> -> vector<8x128xf32>
    %46 = arith.addf %41, %45 : vector<8x128xf32>
    %c0_36 = arith.constant 0 : index
    %c0_37 = arith.constant 0 : index
    %47 = vector.load %arg7[%c0_36, %c0_37] : memref<8x128xf32, #tpu.memory_space<vmem>>, vector<8x128xf32>
    tpu.vector_store %arg7[%c0_36, %c0_37], %46 {strides = array<i32>} : memref<8x128xf32, #tpu.memory_space<vmem>>, vector<8x128xf32>,
    %c0_38 = arith.constant 0 : index
    %c0_39 = arith.constant 0 : index
    %48 = vector.load %arg7[%c0_38, %c0_39] : memref<8x128xf32, #tpu.memory_space<vmem>>, vector<8x128xf32>
    %49 = vector.extract_strided_slice %19 {offsets = [32, 0], sizes = [8, 128], strides = [1, 1]} : vector<56x128xbf16> to vector<8x128xbf16>
    %c4 = arith.constant 4 : index
    %c0_40 = arith.constant 0 : index
    %c0_41 = arith.constant 0 : index
    %50 = vector.load %arg4[%c4, %c0_40, %c0_41] : memref<7x128x128xbf16, #tpu.memory_space<vmem>>, vector<1x128x128xbf16>
    %51 = vector.shape_cast %50 : vector<1x128x128xbf16> to vector<128x128xbf16>
    %cst_42 = arith.constant dense<0.000000e+00> : vector<8x128xf32>
    %52 = tpu.matmul %49, %51, %cst_42 {dimension_numbers = #tpu.dot_dimension_numbers<[1], [0], [0], [1], [0, 0, 1, 1], [], []>} : vector<8x128xbf16>, vector<128x128xbf16>, vector<8x128xf32> -> vector<8x128xf32>
    %53 = arith.addf %48, %52 : vector<8x128xf32>
    %c0_43 = arith.constant 0 : index
    %c0_44 = arith.constant 0 : index
    %54 = vector.load %arg7[%c0_43, %c0_44] : memref<8x128xf32, #tpu.memory_space<vmem>>, vector<8x128xf32>
    tpu.vector_store %arg7[%c0_43, %c0_44], %53 {strides = array<i32>} : memref<8x128xf32, #tpu.memory_space<vmem>>, vector<8x128xf32>,
    %c0_45 = arith.constant 0 : index
    %c0_46 = arith.constant 0 : index
    %55 = vector.load %arg7[%c0_45, %c0_46] : memref<8x128xf32, #tpu.memory_space<vmem>>, vector<8x128xf32>
    %56 = vector.extract_strided_slice %19 {offsets = [40, 0], sizes = [8, 128], strides = [1, 1]} : vector<56x128xbf16> to vector<8x128xbf16>
    %c5 = arith.constant 5 : index
    %c0_47 = arith.constant 0 : index
    %c0_48 = arith.constant 0 : index
    %57 = vector.load %arg4[%c5, %c0_47, %c0_48] : memref<7x128x128xbf16, #tpu.memory_space<vmem>>, vector<1x128x128xbf16>
    %58 = vector.shape_cast %57 : vector<1x128x128xbf16> to vector<128x128xbf16>
    %cst_49 = arith.constant dense<0.000000e+00> : vector<8x128xf32>
    %59 = tpu.matmul %56, %58, %cst_49 {dimension_numbers = #tpu.dot_dimension_numbers<[1], [0], [0], [1], [0, 0, 1, 1], [], []>} : vector<8x128xbf16>, vector<128x128xbf16>, vector<8x128xf32> -> vector<8x128xf32>
    %60 = arith.addf %55, %59 : vector<8x128xf32>
    %c0_50 = arith.constant 0 : index
    %c0_51 = arith.constant 0 : index
    %61 = vector.load %arg7[%c0_50, %c0_51] : memref<8x128xf32, #tpu.memory_space<vmem>>, vector<8x128xf32>
    tpu.vector_store %arg7[%c0_50, %c0_51], %60 {strides = array<i32>} : memref<8x128xf32, #tpu.memory_space<vmem>>, vector<8x128xf32>,
    %c0_52 = arith.constant 0 : index
    %c0_53 = arith.constant 0 : index
    %62 = vector.load %arg7[%c0_52, %c0_53] : memref<8x128xf32, #tpu.memory_space<vmem>>, vector<8x128xf32>
    %63 = vector.extract_strided_slice %19 {offsets = [48, 0], sizes = [8, 128], strides = [1, 1]} : vector<56x128xbf16> to vector<8x128xbf16>
    %c6 = arith.constant 6 : index
    %c0_54 = arith.constant 0 : index
    %c0_55 = arith.constant 0 : index
    %64 = vector.load %arg4[%c6, %c0_54, %c0_55] : memref<7x128x128xbf16, #tpu.memory_space<vmem>>, vector<1x128x128xbf16>
    %65 = vector.shape_cast %64 : vector<1x128x128xbf16> to vector<128x128xbf16>
    %cst_56 = arith.constant dense<0.000000e+00> : vector<8x128xf32>
    %66 = tpu.matmul %63, %65, %cst_56 {dimension_numbers = #tpu.dot_dimension_numbers<[1], [0], [0], [1], [0, 0, 1, 1], [], []>} : vector<8x128xbf16>, vector<128x128xbf16>, vector<8x128xf32> -> vector<8x128xf32>
    %67 = arith.addf %62, %66 : vector<8x128xf32>
    %c0_57 = arith.constant 0 : index
    %c0_58 = arith.constant 0 : index
    %68 = vector.load %arg7[%c0_57, %c0_58] : memref<8x128xf32, #tpu.memory_space<vmem>>, vector<8x128xf32>
    tpu.vector_store %arg7[%c0_57, %c0_58], %67 {strides = array<i32>} : memref<8x128xf32, #tpu.memory_space<vmem>>, vector<8x128xf32>,
    %c6_i32 = arith.constant 6 : i32
    %69 = arith.cmpi eq, %arg1, %c6_i32 : i32
    %70 = arith.extui %69 : i1 to i32
    %c0_i32_59 = arith.constant 0 : i32
    %71 = arith.cmpi ne, %70, %c0_i32_59 : i32
    scf.if %71 {
      %c0_60 = arith.constant 0 : index
      %c0_61 = arith.constant 0 : index
      %72 = vector.load %arg7[%c0_60, %c0_61] : memref<8x128xf32, #tpu.memory_space<vmem>>, vector<8x128xf32>
      %c0_62 = arith.constant 0 : index
      %c0_63 = arith.constant 0 : index
      %73 = vector.load %arg5[%c0_62, %c0_63] : memref<1x128xf32, #tpu.memory_space<vmem>>, vector<1x128xf32>
      %74 = vector.broadcast %73 : vector<1x128xf32> to vector<8x128xf32>
      %75 = arith.addf %72, %74 : vector<8x128xf32>
      %c0_64 = arith.constant 0 : index
      %c0_65 = arith.constant 0 : index
      %76 = vector.load %arg6[%c0_64, %c0_65] : memref<8x128xf32, #tpu.memory_space<vmem>>, vector<8x128xf32>
      tpu.vector_store %arg6[%c0_64, %c0_65], %75 {strides = array<i32>} : memref<8x128xf32, #tpu.memory_space<vmem>>, vector<8x128xf32>,
    } else {
    }
    return
  }
  func.func @transform_0(%arg0: i32, %arg1: i32) -> (i32, i32, i32) {
    %c0_i32 = arith.constant 0 : i32
    %c0_i32_0 = arith.constant 0 : i32
    return %arg1, %arg0, %c0_i32 : i32, i32, i32
  }
  func.func @transform_1(%arg0: i32, %arg1: i32) -> (i32, i32) {
    %c0_i32 = arith.constant 0 : i32
    %c0_i32_0 = arith.constant 0 : i32
    %c0_i32_1 = arith.constant 0 : i32
    return %c0_i32, %c0_i32_0 : i32, i32
  }
  func.func @transform_2(%arg0: i32, %arg1: i32) -> (i32, i32, i32) {
    %c0_i32 = arith.constant 0 : i32
    %c0_i32_0 = arith.constant 0 : i32
    %c0_i32_1 = arith.constant 0 : i32
    return %arg1, %c0_i32, %c0_i32_0 : i32, i32, i32
  }
  func.func @transform_3(%arg0: i32, %arg1: i32) -> (i32, i32) {
    %c0_i32 = arith.constant 0 : i32
    %c0_i32_0 = arith.constant 0 : i32
    %c0_i32_1 = arith.constant 0 : i32
    return %c0_i32, %c0_i32_0 : i32, i32
  }
  func.func @transform_4(%arg0: i32, %arg1: i32) -> (i32, i32) {
    %c0_i32 = arith.constant 0 : i32
    %c0_i32_0 = arith.constant 0 : i32
    return %arg0, %c0_i32 : i32, i32
  }
}

</mosaic_0001>

<llo_original>
// kernel: _forward.2
$region0: #{_forward.2}
  #allocation0 [shape = 'u32[]', space=smem, size = 0x4, offset = 0x4, fixed_abs, tag = 'smem constant byte address 0x4 - core index']
  #allocation1 [shape = 'u32[72,128]{1,0:T(1,128)}', space=vmem, size = 0x9000, scoped, tag = 'internal scratch']
  %s0 = inlined_call_operand.vmem [shape: bf16[200,24], index: 0, kind: input, shape index: {}]
  %s1 = inlined_call_operand.hbm [shape: bf16[24,128], index: 1, kind: input, shape index: {}]
  %s2 = inlined_call_operand.vmem [shape: bf16[200,128], index: 2, kind: output, shape index: {}]
  %s3 = sld [smem:[#allocation0]]
  $region22: #{_forward.2} parent=0
    _
  %s5 = ssub.s32 1, %s3
  %s6 = scalar_select 0, %s5, %s3
  $region1: #{_forward.2} parent=0
    #allocation2 [shape = 'u8[6144]{0}', space=vmem, size = 0x1800, scoped, tag = 'input window, operand 1, single buffered']
    #allocation3 [shape = 's32[1]{0}', space=sflag, size = 0x4, scoped, tag = 'scoped memory for _forward.2']
    %7 = vsyncpa [#allocation3], 0
    // Predicated region
    $region2: #{_forward.2} parent=1 // pred_check
      _
    $region3: #{_forward.2} parent=1 // pred_check_branch
      %9 = sbr.rel (0) target = $region5
    $region4: #{_forward.2} parent=1 // pred_region
      _
    $region5: #{_forward.2} parent=1 // pred_fallthru
      _
    // Predicated region
    $region6: #{_forward.2} parent=1 // pred_check
      _
    $region7: #{_forward.2} parent=1 // pred_check_branch
      %11 = sbr.rel (0) target = $region9
    $region8: #{_forward.2} parent=1 // pred_region
      %13 = vsyncadd [#allocation3], 0
      %s14 = sshll.u32 %s1, 4
      %s15 = int_to_ptr.hbm [resolvable:$true] %s14
      %s16 = sshll.u32 [#allocation2], 4
      %s17 = int_to_ptr.vmem [resolvable:$true] %s16
      %22 = dma.hbm_to_vmem [thread:$0]  %s15, 192, %s17, [#allocation3], 64, 64, 4
    $region9: #{_forward.2} parent=1 // pred_fallthru
      _
    // Predicated region
    $region10: #{_forward.2} parent=1 // pred_check
      _
    $region11: #{_forward.2} parent=1 // pred_check_branch
      %24 = sbr.rel (0) target = $region13
    $region12: #{_forward.2} parent=1 // pred_region
      %26 = dma.done [#allocation3], 192
    $region13: #{_forward.2} parent=1 // pred_fallthru
      _
    %v28 = vld [vmem:[%s0] sm:$0xf]
    %v29 = vld [vmem:[%s0 + $0x4] sm:$0xf]
    %v30 = vld [vmem:[%s0 + $0x8] sm:$0xf]
    %v31 = vld [vmem:[%s0 + $0xc] sm:$0xf]
    %v32 = vld [vmem:[%s0 + $0x10] sm:$0xf]
    %v33 = vld [vmem:[%s0 + $0x14] sm:$0xf]
    %v34 = vld [vmem:[%s0 + $0x18] sm:$0xf]
    %v35 = vld [vmem:[%s0 + $0x1c] sm:$0xf]
    %v36 = vld [vmem:[%s0 + $0x20] sm:$0xf]
    %v37 = vld [vmem:[%s0 + $0x24] sm:$0xf]
    %v38 = vld [vmem:[%s0 + $0x28] sm:$0xf]
    %v39 = vld [vmem:[%s0 + $0x2c] sm:$0xf]
    %v40 = vld [vmem:[%s0 + $0x30] sm:$0xf]
    %v41 = vld [vmem:[%s0 + $0x34] sm:$0xf]
    %v42 = vld [vmem:[%s0 + $0x38] sm:$0xf]
    %v43 = vld [vmem:[%s0 + $0x3c] sm:$0xf]
    %v44 = vld [vmem:[%s0 + $0x40] sm:$0xf]
    %v45 = vld [vmem:[%s0 + $0x44] sm:$0xf]
    %v46 = vld [vmem:[%s0 + $0x48] sm:$0xf]
    %v47 = vld [vmem:[%s0 + $0x4c] sm:$0xf]
    %v48 = vld [vmem:[%s0 + $0x50] sm:$0xf]
    %v49 = vld [vmem:[%s0 + $0x54] sm:$0xf]
    %v50 = vld [vmem:[%s0 + $0x58] sm:$0xf]
    %v51 = vld [vmem:[%s0 + $0x5c] sm:$0xf]
    %v52 = vld [vmem:[%s0 + $0x60] sm:$0xf]
    %v53 = vld [vmem:[#allocation2] sm:$0xf]
    %v54 = vld [vmem:[#allocation2 + $0x4] sm:$0xf]
    %v55 = vld [vmem:[#allocation2 + $0x8] sm:$0xf]
    %v81 = vunpack.c.l.b16 %v28
    %v82 = vunpack.c.l.b16 %v29
    %v83 = vunpack.c.l.b16 %v30
    %v84 = vunpack.c.l.b16 %v31
    %v85 = vunpack.c.l.b16 %v32
    %v86 = vunpack.c.l.b16 %v33
    %v87 = vunpack.c.l.b16 %v34
    %v88 = vunpack.c.l.b16 %v35
    %v89 = vunpack.c.l.b16 %v36
    %v90 = vunpack.c.l.b16 %v37
    %v91 = vunpack.c.l.b16 %v38
    %v92 = vunpack.c.l.b16 %v39
    %v93 = vunpack.c.l.b16 %v40
    %v94 = vunpack.c.l.b16 %v41
    %v95 = vunpack.c.l.b16 %v42
    %v96 = vunpack.c.l.b16 %v43
    %v97 = vunpack.c.l.b16 %v44
    %v98 = vunpack.c.l.b16 %v45
    %v99 = vunpack.c.l.b16 %v46
    %v100 = vunpack.c.l.b16 %v47
    %v101 = vunpack.c.l.b16 %v48
    %v102 = vunpack.c.l.b16 %v49
    %v103 = vunpack.c.l.b16 %v50
    %v104 = vunpack.c.l.b16 %v51
    %v105 = vunpack.c.l.b16 %v52
    %v106 = vpack.c.b16 %v82, %v81
    %v107 = vpack.c.b16 %v84, %v83
    %v108 = vpack.c.b16 %v86, %v85
    %v109 = vpack.c.b16 %v88, %v87
    %v110 = vpack.c.b16 %v90, %v89
    %v111 = vpack.c.b16 %v92, %v91
    %v112 = vpack.c.b16 %v94, %v93
    %v113 = vpack.c.b16 %v96, %v95
    %v114 = vpack.c.b16 %v98, %v97
    %v115 = vpack.c.b16 %v100, %v99
    %v116 = vpack.c.b16 %v102, %v101
    %v117 = vpack.c.b16 %v104, %v103
    %v118 = vpack.c.b16 %v105, %v105
    %v122 = vunpack.c.l.b16 %v53
    %v123 = vunpack.c.l.b16 %v54
    %v124 = vunpack.c.l.b16 %v55
    %v125 = vpack.c.b16 %v123, %v122
    %v126 = vpack.c.b16 %v124, %v124
    %vm128 = vcmask 195584
    %v130 = vsel %vm128, %v106, 0
    %v133 = vsel %vm128, %v107, 0
    %v136 = vsel %vm128, %v108, 0
    %v139 = vsel %vm128, %v109, 0
    %v142 = vsel %vm128, %v110, 0
    %v145 = vsel %vm128, %v111, 0
    %v148 = vsel %vm128, %v112, 0
    %v151 = vsel %vm128, %v113, 0
    %v154 = vsel %vm128, %v114, 0
    %v157 = vsel %vm128, %v115, 0
    %v160 = vsel %vm128, %v116, 0
    %v163 = vsel %vm128, %v117, 0
    %v166 = vsel %vm128, %v118, 0
    %vm168 = vcmask 1043456
    %v170 = vsel %vm168, %v126, 0
    %172 = vmatpush.bf16.msra.mxu0 0
    %173 = vmatpush.bf16.msra.mxu0 0
    %174 = vmatpush.bf16.msra.mxu0 0
    %175 = vmatpush.bf16.msra.mxu0 0
    %176 = vmatpush.bf16.msra.mxu0 0
    %177 = vmatpush.bf16.msra.mxu0 0
    %178 = vmatpush.bf16.msra.mxu0 %v170
    %179 = vmatpush.bf16.msra.mxu0 %v125
    %180 = vmatmul.bf16.gmra.mxu0 %v130
    %v181 = vpop.f32.mrf.mxu0
    %v182 = vadd.f32 0.0, %v181
    %v183 = vpop.f32.mrf.mxu0
    %v184 = vadd.f32 0.0, %v183
    %185 = vmatmul.bf16.gmra.mxu0 %v133
    %v186 = vpop.f32.mrf.mxu0
    %v187 = vadd.f32 0.0, %v186
    %v188 = vpop.f32.mrf.mxu0
    %v189 = vadd.f32 0.0, %v188
    %190 = vmatmul.bf16.gmra.mxu0 %v136
    %v191 = vpop.f32.mrf.mxu0
    %v192 = vadd.f32 0.0, %v191
    %v193 = vpop.f32.mrf.mxu0
    %v194 = vadd.f32 0.0, %v193
    %195 = vmatmul.bf16.gmra.mxu0 %v139
    %v196 = vpop.f32.mrf.mxu0
    %v197 = vadd.f32 0.0, %v196
    %v198 = vpop.f32.mrf.mxu0
    %v199 = vadd.f32 0.0, %v198
    %200 = vmatmul.bf16.gmra.mxu0 %v142
    %v201 = vpop.f32.mrf.mxu0
    %v202 = vadd.f32 0.0, %v201
    %v203 = vpop.f32.mrf.mxu0
    %v204 = vadd.f32 0.0, %v203
    %205 = vmatmul.bf16.gmra.mxu0 %v145
    %v206 = vpop.f32.mrf.mxu0
    %v207 = vadd.f32 0.0, %v206
    %v208 = vpop.f32.mrf.mxu0
    %v209 = vadd.f32 0.0, %v208
    %210 = vmatmul.bf16.gmra.mxu0 %v148
    %v211 = vpop.f32.mrf.mxu0
    %v212 = vadd.f32 0.0, %v211
    %v213 = vpop.f32.mrf.mxu0
    %v214 = vadd.f32 0.0, %v213
    %215 = vmatmul.bf16.gmra.mxu0 %v151
    %v216 = vpop.f32.mrf.mxu0
    %v217 = vadd.f32 0.0, %v216
    %v218 = vpop.f32.mrf.mxu0
    %v219 = vadd.f32 0.0, %v218
    %220 = vmatmul.bf16.gmra.mxu0 %v154
    %v221 = vpop.f32.mrf.mxu0
    %v222 = vadd.f32 0.0, %v221
    %v223 = vpop.f32.mrf.mxu0
    %v224 = vadd.f32 0.0, %v223
    %225 = vmatmul.bf16.gmra.mxu0 %v157
    %v226 = vpop.f32.mrf.mxu0
    %v227 = vadd.f32 0.0, %v226
    %v228 = vpop.f32.mrf.mxu0
    %v229 = vadd.f32 0.0, %v228
    %230 = vmatmul.bf16.gmra.mxu0 %v160
    %v231 = vpop.f32.mrf.mxu0
    %v232 = vadd.f32 0.0, %v231
    %v233 = vpop.f32.mrf.mxu0
    %v234 = vadd.f32 0.0, %v233
    %235 = vmatmul.bf16.gmra.mxu0 %v163
    %v236 = vpop.f32.mrf.mxu0
    %v237 = vadd.f32 0.0, %v236
    %v238 = vpop.f32.mrf.mxu0
    %v239 = vadd.f32 0.0, %v238
    %240 = vmatmul.bf16.gmra.mxu0 %v166
    %v241 = vpop.f32.mrf.mxu0
    %v242 = vadd.f32 0.0, %v241
    %v243 = vpop.f32.mrf.mxu0
    %244 = vdwg.mxu0
    %v245 = vmul.f32 %v182, %v182
    %v246 = vmul.f32 %v184, %v184
    %v247 = vmul.f32 %v187, %v187
    %v248 = vmul.f32 %v189, %v189
    %v249 = vmul.f32 %v192, %v192
    %v250 = vmul.f32 %v194, %v194
    %v251 = vmul.f32 %v197, %v197
    %v252 = vmul.f32 %v199, %v199
    %v253 = vmul.f32 %v202, %v202
    %v254 = vmul.f32 %v204, %v204
    %v255 = vmul.f32 %v207, %v207
    %v256 = vmul.f32 %v209, %v209
    %v257 = vmul.f32 %v212, %v212
    %v258 = vmul.f32 %v214, %v214
    %v259 = vmul.f32 %v217, %v217
    %v260 = vmul.f32 %v219, %v219
    %v261 = vmul.f32 %v222, %v222
    %v262 = vmul.f32 %v224, %v224
    %v263 = vmul.f32 %v227, %v227
    %v264 = vmul.f32 %v229, %v229
    %v265 = vmul.f32 %v232, %v232
    %v266 = vmul.f32 %v234, %v234
    %v267 = vmul.f32 %v237, %v237
    %v268 = vmul.f32 %v239, %v239
    %v269 = vmul.f32 %v242, %v242
    %v270 = vmul.f32 %v245, 0.035677407
    %v271 = vmul.f32 %v246, 0.035677407
    %v272 = vmul.f32 %v247, 0.035677407
    %v273 = vmul.f32 %v248, 0.035677407
    %v274 = vmul.f32 %v249, 0.035677407
    %v275 = vmul.f32 %v250, 0.035677407
    %v276 = vmul.f32 %v251, 0.035677407
    %v277 = vmul.f32 %v252, 0.035677407
    %v278 = vmul.f32 %v253, 0.035677407
    %v279 = vmul.f32 %v254, 0.035677407
    %v280 = vmul.f32 %v255, 0.035677407
    %v281 = vmul.f32 %v256, 0.035677407
    %v282 = vmul.f32 %v257, 0.035677407
    %v283 = vmul.f32 %v258, 0.035677407
    %v284 = vmul.f32 %v259, 0.035677407
    %v285 = vmul.f32 %v260, 0.035677407
    %v286 = vmul.f32 %v261, 0.035677407
    %v287 = vmul.f32 %v262, 0.035677407
    %v288 = vmul.f32 %v263, 0.035677407
    %v289 = vmul.f32 %v264, 0.035677407
    %v290 = vmul.f32 %v265, 0.035677407
    %v291 = vmul.f32 %v266, 0.035677407
    %v292 = vmul.f32 %v267, 0.035677407
    %v293 = vmul.f32 %v268, 0.035677407
    %v294 = vmul.f32 %v269, 0.035677407
    %v295 = vadd.f32 %v270, 0.7978846
    %v296 = vadd.f32 %v271, 0.7978846
    %v297 = vadd.f32 %v272, 0.7978846
    %v298 = vadd.f32 %v273, 0.7978846
    %v299 = vadd.f32 %v274, 0.7978846
    %v300 = vadd.f32 %v275, 0.7978846
    %v301 = vadd.f32 %v276, 0.7978846
    %v302 = vadd.f32 %v277, 0.7978846
    %v303 = vadd.f32 %v278, 0.7978846
    %v304 = vadd.f32 %v279, 0.7978846
    %v305 = vadd.f32 %v280, 0.7978846
    %v306 = vadd.f32 %v281, 0.7978846
    %v307 = vadd.f32 %v282, 0.7978846
    %v308 = vadd.f32 %v283, 0.7978846
    %v309 = vadd.f32 %v284, 0.7978846
    %v310 = vadd.f32 %v285, 0.7978846
    %v311 = vadd.f32 %v286, 0.7978846
    %v312 = vadd.f32 %v287, 0.7978846
    %v313 = vadd.f32 %v288, 0.7978846
    %v314 = vadd.f32 %v289, 0.7978846
    %v315 = vadd.f32 %v290, 0.7978846
    %v316 = vadd.f32 %v291, 0.7978846
    %v317 = vadd.f32 %v292, 0.7978846
    %v318 = vadd.f32 %v293, 0.7978846
    %v319 = vadd.f32 %v294, 0.7978846
    %v320 = vmul.f32 %v182, %v295
    %v321 = vmul.f32 %v184, %v296
    %v322 = vmul.f32 %v187, %v297
    %v323 = vmul.f32 %v189, %v298
    %v324 = vmul.f32 %v192, %v299
    %v325 = vmul.f32 %v194, %v300
    %v326 = vmul.f32 %v197, %v301
    %v327 = vmul.f32 %v199, %v302
    %v328 = vmul.f32 %v202, %v303
    %v329 = vmul.f32 %v204, %v304
    %v330 = vmul.f32 %v207, %v305
    %v331 = vmul.f32 %v209, %v306
    %v332 = vmul.f32 %v212, %v307
    %v333 = vmul.f32 %v214, %v308
    %v334 = vmul.f32 %v217, %v309
    %v335 = vmul.f32 %v219, %v310
    %v336 = vmul.f32 %v222, %v311
    %v337 = vmul.f32 %v224, %v312
    %v338 = vmul.f32 %v227, %v313
    %v339 = vmul.f32 %v229, %v314
    %v340 = vmul.f32 %v232, %v315
    %v341 = vmul.f32 %v234, %v316
    %v342 = vmul.f32 %v237, %v317
    %v343 = vmul.f32 %v239, %v318
    %v344 = vmul.f32 %v242, %v319
    %v345 = vmul.f32 %v182, 0.5
    %v346 = vmul.f32 %v184, 0.5
    %v347 = vmul.f32 %v187, 0.5
    %v348 = vmul.f32 %v189, 0.5
    %v349 = vmul.f32 %v192, 0.5
    %v350 = vmul.f32 %v194, 0.5
    %v351 = vmul.f32 %v197, 0.5
    %v352 = vmul.f32 %v199, 0.5
    %v353 = vmul.f32 %v202, 0.5
    %v354 = vmul.f32 %v204, 0.5
    %v355 = vmul.f32 %v207, 0.5
    %v356 = vmul.f32 %v209, 0.5
    %v357 = vmul.f32 %v212, 0.5
    %v358 = vmul.f32 %v214, 0.5
    %v359 = vmul.f32 %v217, 0.5
    %v360 = vmul.f32 %v219, 0.5
    %v361 = vmul.f32 %v222, 0.5
    %v362 = vmul.f32 %v224, 0.5
    %v363 = vmul.f32 %v227, 0.5
    %v364 = vmul.f32 %v229, 0.5
    %v365 = vmul.f32 %v232, 0.5
    %v366 = vmul.f32 %v234, 0.5
    %v367 = vmul.f32 %v237, 0.5
    %v368 = vmul.f32 %v239, 0.5
    %v369 = vmul.f32 %v242, 0.5
    %v370 = vtanh.pop %v320
    %v371 = vtanh.pop %v321
    %v372 = vtanh.pop %v322
    %v373 = vtanh.pop %v323
    %v374 = vtanh.pop %v324
    %v375 = vtanh.pop %v325
    %v376 = vtanh.pop %v326
    %v377 = vtanh.pop %v327
    %v378 = vtanh.pop %v328
    %v379 = vtanh.pop %v329
    %v380 = vtanh.pop %v330
    %v381 = vtanh.pop %v331
    %v382 = vtanh.pop %v332
    %v383 = vtanh.pop %v333
    %v384 = vtanh.pop %v334
    %v385 = vtanh.pop %v335
    %v386 = vtanh.pop %v336
    %v387 = vtanh.pop %v337
    %v388 = vtanh.pop %v338
    %v389 = vtanh.pop %v339
    %v390 = vtanh.pop %v340
    %v391 = vtanh.pop %v341
    %v392 = vtanh.pop %v342
    %v393 = vtanh.pop %v343
    %v394 = vtanh.pop %v344
    %v395 = vadd.f32 %v370, 1.0
    %v396 = vadd.f32 %v371, 1.0
    %v397 = vadd.f32 %v372, 1.0
    %v398 = vadd.f32 %v373, 1.0
    %v399 = vadd.f32 %v374, 1.0
    %v400 = vadd.f32 %v375, 1.0
    %v401 = vadd.f32 %v376, 1.0
    %v402 = vadd.f32 %v377, 1.0
    %v403 = vadd.f32 %v378, 1.0
    %v404 = vadd.f32 %v379, 1.0
    %v405 = vadd.f32 %v380, 1.0
    %v406 = vadd.f32 %v381, 1.0
    %v407 = vadd.f32 %v382, 1.0
    %v408 = vadd.f32 %v383, 1.0
    %v409 = vadd.f32 %v384, 1.0
    %v410 = vadd.f32 %v385, 1.0
    %v411 = vadd.f32 %v386, 1.0
    %v412 = vadd.f32 %v387, 1.0
    %v413 = vadd.f32 %v388, 1.0
    %v414 = vadd.f32 %v389, 1.0
    %v415 = vadd.f32 %v390, 1.0
    %v416 = vadd.f32 %v391, 1.0
    %v417 = vadd.f32 %v392, 1.0
    %v418 = vadd.f32 %v393, 1.0
    %v419 = vadd.f32 %v394, 1.0
    %v420 = vmul.f32 %v345, %v395
    %v421 = vmul.f32 %v346, %v396
    %v422 = vmul.f32 %v347, %v397
    %v423 = vmul.f32 %v348, %v398
    %v424 = vmul.f32 %v349, %v399
    %v425 = vmul.f32 %v350, %v400
    %v426 = vmul.f32 %v351, %v401
    %v427 = vmul.f32 %v352, %v402
    %v428 = vmul.f32 %v353, %v403
    %v429 = vmul.f32 %v354, %v404
    %v430 = vmul.f32 %v355, %v405
    %v431 = vmul.f32 %v356, %v406
    %v432 = vmul.f32 %v357, %v407
    %v433 = vmul.f32 %v358, %v408
    %v434 = vmul.f32 %v359, %v409
    %v435 = vmul.f32 %v360, %v410
    %v436 = vmul.f32 %v361, %v411
    %v437 = vmul.f32 %v362, %v412
    %v438 = vmul.f32 %v363, %v413
    %v439 = vmul.f32 %v364, %v414
    %v440 = vmul.f32 %v365, %v415
    %v441 = vmul.f32 %v366, %v416
    %v442 = vmul.f32 %v367, %v417
    %v443 = vmul.f32 %v368, %v418
    %v444 = vmul.f32 %v369, %v419
    %v445 = vpack.c.bf16 %v420, %v420
    %v446 = vpack.c.bf16 %v421, %v421
    %v447 = vpack.c.bf16 %v422, %v422
    %v448 = vpack.c.bf16 %v423, %v423
    %v449 = vpack.c.bf16 %v424, %v424
    %v450 = vpack.c.bf16 %v425, %v425
    %v451 = vpack.c.bf16 %v426, %v426
    %v452 = vpack.c.bf16 %v427, %v427
    %v453 = vpack.c.bf16 %v428, %v428
    %v454 = vpack.c.bf16 %v429, %v429
    %v455 = vpack.c.bf16 %v430, %v430
    %v456 = vpack.c.bf16 %v431, %v431
    %v457 = vpack.c.bf16 %v432, %v432
    %v458 = vpack.c.bf16 %v433, %v433
    %v459 = vpack.c.bf16 %v434, %v434
    %v460 = vpack.c.bf16 %v435, %v435
    %v461 = vpack.c.bf16 %v436, %v436
    %v462 = vpack.c.bf16 %v437, %v437
    %v463 = vpack.c.bf16 %v438, %v438
    %v464 = vpack.c.bf16 %v439, %v439
    %v465 = vpack.c.bf16 %v440, %v440
    %v466 = vpack.c.bf16 %v441, %v441
    %v467 = vpack.c.bf16 %v442, %v442
    %v468 = vpack.c.bf16 %v443, %v443
    %v469 = vpack.c.bf16 %v444, %v444
    %470 = vst [vmem:[%s2] sm:$0xf] %v445
    %471 = vst [vmem:[%s2 + $0x4] sm:$0xf] %v446
    %472 = vst [vmem:[%s2 + $0x8] sm:$0xf] %v447
    %473 = vst [vmem:[%s2 + $0xc] sm:$0xf] %v448
    %474 = vst [vmem:[%s2 + $0x10] sm:$0xf] %v449
    %475 = vst [vmem:[%s2 + $0x14] sm:$0xf] %v450
    %476 = vst [vmem:[%s2 + $0x18] sm:$0xf] %v451
    %477 = vst [vmem:[%s2 + $0x1c] sm:$0xf] %v452
    %478 = vst [vmem:[%s2 + $0x20] sm:$0xf] %v453
    %479 = vst [vmem:[%s2 + $0x24] sm:$0xf] %v454
    %480 = vst [vmem:[%s2 + $0x28] sm:$0xf] %v455
    %481 = vst [vmem:[%s2 + $0x2c] sm:$0xf] %v456
    %482 = vst [vmem:[%s2 + $0x30] sm:$0xf] %v457
    %483 = vst [vmem:[%s2 + $0x34] sm:$0xf] %v458
    %484 = vst [vmem:[%s2 + $0x38] sm:$0xf] %v459
    %485 = vst [vmem:[%s2 + $0x3c] sm:$0xf] %v460
    %486 = vst [vmem:[%s2 + $0x40] sm:$0xf] %v461
    %487 = vst [vmem:[%s2 + $0x44] sm:$0xf] %v462
    %488 = vst [vmem:[%s2 + $0x48] sm:$0xf] %v463
    %489 = vst [vmem:[%s2 + $0x4c] sm:$0xf] %v464
    %490 = vst [vmem:[%s2 + $0x50] sm:$0xf] %v465
    %491 = vst [vmem:[%s2 + $0x54] sm:$0xf] %v466
    %492 = vst [vmem:[%s2 + $0x58] sm:$0xf] %v467
    %493 = vst [vmem:[%s2 + $0x5c] sm:$0xf] %v468
    %494 = vst [vmem:[%s2 + $0x60] sm:$0xf] %v469
    // Predicated region
    $region14: #{_forward.2} parent=1 // pred_check
      _
    $region15: #{_forward.2} parent=1 // pred_check_branch
      %496 = sbr.rel (0) target = $region17
    $region16: #{_forward.2} parent=1 // pred_region
      _
    $region17: #{_forward.2} parent=1 // pred_fallthru
      _
    // Predicated region
    $region18: #{_forward.2} parent=1 // pred_check
      _
    $region19: #{_forward.2} parent=1 // pred_check_branch
      %498 = sbr.rel (0) target = $region21
    $region20: #{_forward.2} parent=1 // pred_region
      _
    $region21: #{_forward.2} parent=1 // pred_fallthru
      _
    %499 = vsyncpa [#allocation3], 1

// kernel: _forward.3
$region0: #{_forward.3}
  #allocation0 [shape = 'u32[]', space=smem, size = 0x4, offset = 0x4, fixed_abs, tag = 'smem constant byte address 0x4 - core index']
  #allocation1 [shape = 'u32[72,128]{1,0:T(1,128)}', space=vmem, size = 0x9000, scoped, tag = 'internal scratch']
  #allocation2 [shape = 'f32[8,128]{1,0:T(8,128)}', space=vmem, size = 0x1000, scoped, tag = 'scratch operand']
  %s0 = inlined_call_operand.vmem [shape: bf16[49,8,1024], index: 0, kind: input, shape index: {}]
  %s1 = inlined_call_operand.vmem [shape: bf16[1024,128], index: 1, kind: input, shape index: {}]
  %s2 = inlined_call_operand.vmem [shape: bf16[49,128,128], index: 2, kind: input, shape index: {}]
  %s3 = inlined_call_operand.vmem [shape: f32[1,128], index: 3, kind: input, shape index: {}]
  %s4 = inlined_call_operand.vmem [shape: f32[8,128], index: 4, kind: output, shape index: {}]
  %s5 = sld [smem:[#allocation0]]
  $region57: #{_forward.3} parent=0
    _
  %s7 = ssub.s32 1, %s5
  %s8 = scalar_select 0, %s7, %s5
  loop: start=0, step=1, limit=9
  $region2: #{_forward.3} parent=0 // loop_pre_header
    _
  $region3: #{_forward.3} parent=0 // loop_header
    %s10 = sphi 0, %s14
    %p11 = scmp.ge.s32.totalorder %s10, 9
    %s17 = sphi 0, %s29
    %s18 = sphi 0, %s25
    %s19 = sphi 0, %s17
    %s20 = sphi 0, %s18
    %s21 = sphi 0, %s19
    %s22 = sphi 0, %s20
    %s34 = sphi 0, %s36
    %s37 = sphi 0, %s34
    %s38 = sphi 0, %s37
    %s54 = sphi 0, %s38
    %s58 = sphi 0, %s58
    %s60 = sphi 0, %s58
    %s61 = sphi 0, %s60
    %s75 = sphi 0, %s61
    %s81 = sphi 0, %s83
    %s84 = sphi 0, %s81
    %s85 = sphi 0, %s84
    %s101 = sphi 0, %s85
    %s105 = sphi 0, %s105
    %s107 = sphi 0, %s105
    %s108 = sphi 0, %s107
    %s122 = sphi 0, %s108
    %s128 = sphi 0, %s130
    %s131 = sphi 0, %s128
    %s132 = sphi 0, %s131
    %s148 = sphi 0, %s132
  $region4: #{_forward.3} parent=0 // loop_header_branch
    %13 = sbr.rel (%p11) target = $region8
  $region5: #{_forward.3} parent=0 // loop_body
    %s15 = ssub.s32 %s10, 1
    %s16 = ssub.s32 %s10, 2
    %s23 = sadd.s32 1, %s18
    %p24 = scmp.ge.s32.totalorder %s23, 7
    %s25 = scalar_select %p24, 0, %s23
    %s26 = sadd.s32 1, %s17
    %s27 = scalar_select %p24, %s26, %s17
    %p28 = scmp.ge.s32.totalorder %s27, 1
    %s29 = scalar_select %p28, 0, %s27
    %s30 = ssub.s32 %s18, %s25
    %s31 = ssub.s32 %s17, %s29
    %s32 = sor.u32 %s30, %s31
    %p33 = scmp.eq.s32.totalorder %s32, 0
    %s35 = sadd.s32 %s34, 1
    %s36 = scalar_select %p33, %s34, %s35
    %p39 = pneg %p33
    %p40 = scmp.eq.s32.totalorder %s10, 6
    %p41 = por %p39, %p40
    %p42 = scmp.ne.s32.totalorder %s34, %s37
    %p43 = scmp.eq.s32.totalorder %s10, 0
    %p44 = por %p42, %p43
    %p45 = scmp.ne.s32.totalorder %s34, %s37
    %p46 = scmp.eq.s32.totalorder %s15, 6
    %p47 = por %p45, %p46
    %p48 = scmp.ne.s32.totalorder %s37, %s38
    %p49 = scmp.eq.s32.totalorder %s15, 0
    %p50 = por %p48, %p49
    %p51 = scmp.ne.s32.totalorder %s37, %s38
    %p52 = scmp.eq.s32.totalorder %s16, 6
    %p53 = por %p51, %p52
    %p55 = scmp.ne.s32.totalorder %s38, %s54
    %p56 = scmp.eq.s32.totalorder %s16, 0
    %p57 = por %p55, %p56
    %s59 = sadd.s32 %s58, 1
    %p62 = scmp.eq.s32.totalorder %s10, 6
    %p63 = scmp.ne.s32.totalorder %s58, %s60
    %p64 = scmp.eq.s32.totalorder %s10, 0
    %p65 = por %p63, %p64
    %p66 = scmp.ne.s32.totalorder %s58, %s60
    %p67 = scmp.eq.s32.totalorder %s15, 6
    %p68 = por %p66, %p67
    %p69 = scmp.ne.s32.totalorder %s60, %s61
    %p70 = scmp.eq.s32.totalorder %s15, 0
    %p71 = por %p69, %p70
    %p72 = scmp.ne.s32.totalorder %s60, %s61
    %p73 = scmp.eq.s32.totalorder %s16, 6
    %p74 = por %p72, %p73
    %p76 = scmp.ne.s32.totalorder %s61, %s75
    %p77 = scmp.eq.s32.totalorder %s16, 0
    %p78 = por %p76, %p77
    %s79 = ssub.s32 %s18, %s25
    %p80 = scmp.eq.s32.totalorder %s79, 0
    %s82 = sadd.s32 %s81, 1
    %s83 = scalar_select %p80, %s81, %s82
    %p86 = pneg %p80
    %p87 = scmp.eq.s32.totalorder %s10, 6
    %p88 = por %p86, %p87
    %p89 = scmp.ne.s32.totalorder %s81, %s84
    %p90 = scmp.eq.s32.totalorder %s10, 0
    %p91 = por %p89, %p90
    %p92 = scmp.ne.s32.totalorder %s81, %s84
    %p93 = scmp.eq.s32.totalorder %s15, 6
    %p94 = por %p92, %p93
    %p95 = scmp.ne.s32.totalorder %s84, %s85
    %p96 = scmp.eq.s32.totalorder %s15, 0
    %p97 = por %p95, %p96
    %p98 = scmp.ne.s32.totalorder %s84, %s85
    %p99 = scmp.eq.s32.totalorder %s16, 6
    %p100 = por %p98, %p99
    %p102 = scmp.ne.s32.totalorder %s85, %s101
    %p103 = scmp.eq.s32.totalorder %s16, 0
    %p104 = por %p102, %p103
    %s106 = sadd.s32 %s105, 1
    %p109 = scmp.eq.s32.totalorder %s10, 6
    %p110 = scmp.ne.s32.totalorder %s105, %s107
    %p111 = scmp.eq.s32.totalorder %s10, 0
    %p112 = por %p110, %p111
    %p113 = scmp.ne.s32.totalorder %s105, %s107
    %p114 = scmp.eq.s32.totalorder %s15, 6
    %p115 = por %p113, %p114
    %p116 = scmp.ne.s32.totalorder %s107, %s108
    %p117 = scmp.eq.s32.totalorder %s15, 0
    %p118 = por %p116, %p117
    %p119 = scmp.ne.s32.totalorder %s107, %s108
    %p120 = scmp.eq.s32.totalorder %s16, 6
    %p121 = por %p119, %p120
    %p123 = scmp.ne.s32.totalorder %s108, %s122
    %p124 = scmp.eq.s32.totalorder %s16, 0
    %p125 = por %p123, %p124
    %s126 = ssub.s32 %s17, %s29
    %p127 = scmp.eq.s32.totalorder %s126, 0
    %s129 = sadd.s32 %s128, 1
    %s130 = scalar_select %p127, %s128, %s129
    %p133 = pneg %p127
    %p134 = scmp.eq.s32.totalorder %s10, 6
    %p135 = por %p133, %p134
    %p136 = scmp.ne.s32.totalorder %s128, %s131
    %p137 = scmp.eq.s32.totalorder %s10, 0
    %p138 = por %p136, %p137
    %p139 = scmp.ne.s32.totalorder %s128, %s131
    %p140 = scmp.eq.s32.totalorder %s15, 6
    %p141 = por %p139, %p140
    %p142 = scmp.ne.s32.totalorder %s131, %s132
    %p143 = scmp.eq.s32.totalorder %s15, 0
    %p144 = por %p142, %p143
    %p145 = scmp.ne.s32.totalorder %s131, %s132
    %p146 = scmp.eq.s32.totalorder %s16, 6
    %p147 = por %p145, %p146
    %p149 = scmp.ne.s32.totalorder %s132, %s148
    %p150 = scmp.eq.s32.totalorder %s16, 0
    %p151 = por %p149, %p150
    %p152 = scmp.le.s32.totalorder 1, %s10
    %p153 = scmp.lt.s32.totalorder %s10, 8
    %p154 = pnand %p152, %p153
    %p155 = pneg %p154
    // Predicated region
    $region9: #{_forward.3} parent=5 // pred_check
      _
    $region10: #{_forward.3} parent=5 // pred_check_branch
      %157 = sbr.rel (%p154) target = $region12
    $region11: #{_forward.3} parent=5 // pred_region
      %s158 = ssub.s32 %s10, 1
      // Predicated region
      $region13: #{_forward.3} parent=11 // pred_check
        %p159 = pneg %p71
      $region14: #{_forward.3} parent=11 // pred_check_branch
        %161 = sbr.rel (%p159) target = $region16
      $region15: #{_forward.3} parent=11 // pred_region
        _
      $region16: #{_forward.3} parent=11 // pred_fallthru
        _
      // Predicated region
      $region17: #{_forward.3} parent=11 // pred_check
        %p162 = pneg %p118
      $region18: #{_forward.3} parent=11 // pred_check_branch
        %164 = sbr.rel (%p162) target = $region20
      $region19: #{_forward.3} parent=11 // pred_region
        _
      $region20: #{_forward.3} parent=11 // pred_fallthru
        _
    $region12: #{_forward.3} parent=5 // pred_fallthru
      _
    %p165 = scmp.lt.s32.totalorder %s10, 7
    // Predicated region
    $region21: #{_forward.3} parent=5 // pred_check
      %p166 = pneg %p165
    $region22: #{_forward.3} parent=5 // pred_check_branch
      %168 = sbr.rel (%p166) target = $region24
    $region23: #{_forward.3} parent=5 // pred_region
      // Predicated region
      $region25: #{_forward.3} parent=23 // pred_check
        %p169 = pneg %p44
      $region26: #{_forward.3} parent=23 // pred_check_branch
        %171 = sbr.rel (%p169) target = $region28
      $region27: #{_forward.3} parent=23 // pred_region
        %s172 = smul.u32 7, %s18
        %p173 = scmp.lt.s32.totalorder %s172, 48
        %s174 = scalar_select %p173, %s172, 48
        %p175 = scmp.lt.s32.totalorder %s17, 0
        %s176 = scalar_select %p175, %s17, 0
        %s177 = smul.addr %s176, 8
        %s178 = smul.addr %s174, 8
        %s179 = sadd.s32 %s177, %s178
        %s180 = smul.addr %s179, 4
        %s181 = scalar_lea.vmem %s0, %s180
        %s182 = smul.u32 7, %s18
      $region28: #{_forward.3} parent=23 // pred_fallthru
        _
      // Predicated region
      $region29: #{_forward.3} parent=23 // pred_check
        %p183 = pneg %p91
      $region30: #{_forward.3} parent=23 // pred_check_branch
        %185 = sbr.rel (%p183) target = $region32
      $region31: #{_forward.3} parent=23 // pred_region
        %s186 = smul.u32 7, %s18
        %p187 = scmp.lt.s32.totalorder %s186, 48
        %s188 = scalar_select %p187, %s186, 48
        %s189 = smul.addr %s188, 16
        %s190 = smul.addr %s189, 4
        %s191 = scalar_lea.vmem %s2, %s190
        %s192 = smul.u32 7, %s18
      $region32: #{_forward.3} parent=23 // pred_fallthru
        _
    $region24: #{_forward.3} parent=5 // pred_fallthru
      _
    %p193 = scmp.le.s32.totalorder 1, %s10
    %p194 = scmp.lt.s32.totalorder %s10, 8
    %p195 = pnand %p193, %p194
    %p196 = pneg %p195
    // Predicated region
    $region33: #{_forward.3} parent=5 // pred_check
      _
    $region34: #{_forward.3} parent=5 // pred_check_branch
      %198 = sbr.rel (%p195) target = $region36
    $region35: #{_forward.3} parent=5 // pred_region
      %s199 = ssub.s32 %s10, 1
      %s200 = smul.u32 7, %s20
      %p201 = scmp.lt.s32.totalorder %s200, 48
      %s202 = scalar_select %p201, %s200, 48
      %p203 = scmp.lt.s32.totalorder %s19, 0
      %s204 = scalar_select %p203, %s19, 0
      %s205 = smul.addr %s204, 8
      %s206 = smul.addr %s202, 8
      %s207 = sadd.s32 %s205, %s206
      %s208 = smul.addr %s207, 4
      %s209 = scalar_lea.vmem %s0, %s208
      %p210 = pneg %p50
      %p211 = pneg %p47
      %p212 = pneg %p71
      %p213 = pneg %p68
      %s214 = smul.u32 7, %s20
      %p215 = scmp.lt.s32.totalorder %s214, 48
      %s216 = scalar_select %p215, %s214, 48
      %s217 = smul.addr %s216, 16
      %s218 = smul.addr %s217, 4
      %s219 = scalar_lea.vmem %s2, %s218
      %p220 = pneg %p97
      %p221 = pneg %p94
      %p222 = pneg %p118
      %p223 = pneg %p115
      %p224 = pneg %p144
      %p225 = pneg %p141
      %p226 = scmp.lt.s32.totalorder %s19, 0
      %s227 = scalar_select %p226, %s19, 0
      %s228 = smul.addr %s227, 8
      %s229 = scalar_lea.vmem %s4, %s228
      %s230 = smul.u32 7, %s20
      %p231 = scmp.lt.s32.totalorder %s230, 48
      %s232 = scalar_select %p231, %s230, 48
      %p233 = scmp.lt.s32.totalorder %s19, 0
      %s234 = scalar_select %p233, %s19, 0
      %s235 = smul.addr %s234, 8
      %s236 = smul.addr %s232, 8
      %s237 = sadd.s32 %s235, %s236
      %s238 = smul.addr %s237, 4
      %s239 = scalar_lea.vmem %s0, %s238
      %s240 = smul.u32 7, %s20
      %s241 = smul.u32 7, %s20
      %p242 = scmp.lt.s32.totalorder %s241, 48
      %s243 = scalar_select %p242, %s241, 48
      %s244 = smul.addr %s243, 16
      %s245 = smul.addr %s244, 4
      %s246 = scalar_lea.vmem %s2, %s245
      %s247 = smul.u32 7, %s20
      %p248 = scmp.lt.s32.totalorder %s19, 0
      %s249 = scalar_select %p248, %s19, 0
      %s250 = smul.addr %s249, 8
      %s251 = scalar_lea.vmem %s4, %s250
      %p252 = scmp.eq.s32.totalorder %s20, 0
      // Predicated region
      $region37: #{_forward.3} parent=35 // pred_check
        %p253 = pneg %p252
      $region38: #{_forward.3} parent=35 // pred_check_branch
        %255 = sbr.rel (%p253) target = $region40
      $region39: #{_forward.3} parent=35 // pred_region
        %256 = vst [vmem:[#allocation2] sm:$0xff] 0.0
      $region40: #{_forward.3} parent=35 // pred_fallthru
        _
      %v257 = vld [vmem:[%s239] sm:$0xff]
      %v258 = vld [vmem:[%s239 + $0x8] sm:$0xff]
      %v259 = vld [vmem:[%s239 + $0x10] sm:$0xff]
      %v260 = vld [vmem:[%s239 + $0x18] sm:$0xff]
      %v261 = vld [vmem:[%s239 + $0x20] sm:$0xff]
      %v262 = vld [vmem:[%s239 + $0x28] sm:$0xff]
      %v263 = vld [vmem:[%s239 + $0x30] sm:$0xff]
      %v264 = vld [vmem:[%s239 + $0x38] sm:$0xff]
      %v265 = vld [vmem:[%s239 + $0x40] sm:$0xff]
      %v266 = vld [vmem:[%s239 + $0x48] sm:$0xff]
      %v267 = vld [vmem:[%s239 + $0x50] sm:$0xff]
      %v268 = vld [vmem:[%s239 + $0x58] sm:$0xff]
      %v269 = vld [vmem:[%s239 + $0x60] sm:$0xff]
      %v270 = vld [vmem:[%s239 + $0x68] sm:$0xff]
      %v271 = vld [vmem:[%s239 + $0x70] sm:$0xff]
      %v272 = vld [vmem:[%s239 + $0x78] sm:$0xff]
      %v273 = vld [vmem:[%s239 + $0x80] sm:$0xff]
      %v274 = vld [vmem:[%s239 + $0x88] sm:$0xff]
      %v275 = vld [vmem:[%s239 + $0x90] sm:$0xff]
      %v276 = vld [vmem:[%s239 + $0x98] sm:$0xff]
      %v277 = vld [vmem:[%s239 + $0xa0] sm:$0xff]
      %v278 = vld [vmem:[%s239 + $0xa8] sm:$0xff]
      %v279 = vld [vmem:[%s239 + $0xb0] sm:$0xff]
      %v280 = vld [vmem:[%s239 + $0xb8] sm:$0xff]
      %v281 = vld [vmem:[%s239 + $0xc0] sm:$0xff]
      %v282 = vld [vmem:[%s239 + $0xc8] sm:$0xff]
      %v283 = vld [vmem:[%s239 + $0xd0] sm:$0xff]
      %v284 = vld [vmem:[%s239 + $0xd8] sm:$0xff]
      %v285 = vld [vmem:[%s1] sm:$0xf]
      %v286 = vld [vmem:[%s1 + $0x4] sm:$0xf]
      %v287 = vld [vmem:[%s1 + $0x8] sm:$0xf]
      %v288 = vld [vmem:[%s1 + $0xc] sm:$0xf]
      %v289 = vld [vmem:[%s1 + $0x10] sm:$0xf]
      %v290 = vld [vmem:[%s1 + $0x14] sm:$0xf]
      %v291 = vld [vmem:[%s1 + $0x18] sm:$0xf]
      %v292 = vld [vmem:[%s1 + $0x1c] sm:$0xf]
      %v293 = vld [vmem:[%s1 + $0x20] sm:$0xf]
      %v294 = vld [vmem:[%s1 + $0x24] sm:$0xf]
      %v295 = vld [vmem:[%s1 + $0x28] sm:$0xf]
      %v296 = vld [vmem:[%s1 + $0x2c] sm:$0xf]
      %v297 = vld [vmem:[%s1 + $0x30] sm:$0xf]
      %v298 = vld [vmem:[%s1 + $0x34] sm:$0xf]
      %v299 = vld [vmem:[%s1 + $0x38] sm:$0xf]
      %v300 = vld [vmem:[%s1 + $0x3c] sm:$0xf]
      %v301 = vld [vmem:[%s1 + $0x40] sm:$0xf]
      %v302 = vld [vmem:[%s1 + $0x44] sm:$0xf]
      %v303 = vld [vmem:[%s1 + $0x48] sm:$0xf]
      %v304 = vld [vmem:[%s1 + $0x4c] sm:$0xf]
      %v305 = vld [vmem:[%s1 + $0x50] sm:$0xf]
      %v306 = vld [vmem:[%s1 + $0x54] sm:$0xf]
      %v307 = vld [vmem:[%s1 + $0x58] sm:$0xf]
      %v308 = vld [vmem:[%s1 + $0x5c] sm:$0xf]
      %v309 = vld [vmem:[%s1 + $0x60] sm:$0xf]
      %v310 = vld [vmem:[%s1 + $0x64] sm:$0xf]
      %v311 = vld [vmem:[%s1 + $0x68] sm:$0xf]
      %v312 = vld [vmem:[%s1 + $0x6c] sm:$0xf]
      %v313 = vld [vmem:[%s1 + $0x70] sm:$0xf]
      %v314 = vld [vmem:[%s1 + $0x74] sm:$0xf]
      %v315 = vld [vmem:[%s1 + $0x78] sm:$0xf]
      %v316 = vld [vmem:[%s1 + $0x7c] sm:$0xf]
      %v317 = vld [vmem:[%s1 + $0x80] sm:$0xf]
      %v318 = vld [vmem:[%s1 + $0x84] sm:$0xf]
      %v319 = vld [vmem:[%s1 + $0x88] sm:$0xf]
      %v320 = vld [vmem:[%s1 + $0x8c] sm:$0xf]
      %v321 = vld [vmem:[%s1 + $0x90] sm:$0xf]
      %v322 = vld [vmem:[%s1 + $0x94] sm:$0xf]
      %v323 = vld [vmem:[%s1 + $0x98] sm:$0xf]
      %v324 = vld [vmem:[%s1 + $0x9c] sm:$0xf]
      %v325 = vld [vmem:[%s1 + $0xa0] sm:$0xf]
      %v326 = vld [vmem:[%s1 + $0xa4] sm:$0xf]
      %v327 = vld [vmem:[%s1 + $0xa8] sm:$0xf]
      %v328 = vld [vmem:[%s1 + $0xac] sm:$0xf]
      %v329 = vld [vmem:[%s1 + $0xb0] sm:$0xf]
      %v330 = vld [vmem:[%s1 + $0xb4] sm:$0xf]
      %v331 = vld [vmem:[%s1 + $0xb8] sm:$0xf]
      %v332 = vld [vmem:[%s1 + $0xbc] sm:$0xf]
      %v333 = vld [vmem:[%s1 + $0xc0] sm:$0xf]
      %v334 = vld [vmem:[%s1 + $0xc4] sm:$0xf]
      %v335 = vld [vmem:[%s1 + $0xc8] sm:$0xf]
      %v336 = vld [vmem:[%s1 + $0xcc] sm:$0xf]
      %v337 = vld [vmem:[%s1 + $0xd0] sm:$0xf]
      %v338 = vld [vmem:[%s1 + $0xd4] sm:$0xf]
      %v339 = vld [vmem:[%s1 + $0xd8] sm:$0xf]
      %v340 = vld [vmem:[%s1 + $0xdc] sm:$0xf]
      %v341 = vld [vmem:[%s1 + $0xe0] sm:$0xf]
      %v342 = vld [vmem:[%s1 + $0xe4] sm:$0xf]
      %v343 = vld [vmem:[%s1 + $0xe8] sm:$0xf]
      %v344 = vld [vmem:[%s1 + $0xec] sm:$0xf]
      %v345 = vld [vmem:[%s1 + $0xf0] sm:$0xf]
      %v346 = vld [vmem:[%s1 + $0xf4] sm:$0xf]
      %v347 = vld [vmem:[%s1 + $0xf8] sm:$0xf]
      %v348 = vld [vmem:[%s1 + $0xfc] sm:$0xf]
      %v349 = vld [vmem:[%s1 + $0x100] sm:$0xf]
      %v350 = vld [vmem:[%s1 + $0x104] sm:$0xf]
      %v351 = vld [vmem:[%s1 + $0x108] sm:$0xf]
      %v352 = vld [vmem:[%s1 + $0x10c] sm:$0xf]
      %v353 = vld [vmem:[%s1 + $0x110] sm:$0xf]
      %v354 = vld [vmem:[%s1 + $0x114] sm:$0xf]
      %v355 = vld [vmem:[%s1 + $0x118] sm:$0xf]
      %v356 = vld [vmem:[%s1 + $0x11c] sm:$0xf]
      %v357 = vld [vmem:[%s1 + $0x120] sm:$0xf]
      %v358 = vld [vmem:[%s1 + $0x124] sm:$0xf]
      %v359 = vld [vmem:[%s1 + $0x128] sm:$0xf]
      %v360 = vld [vmem:[%s1 + $0x12c] sm:$0xf]
      %v361 = vld [vmem:[%s1 + $0x130] sm:$0xf]
      %v362 = vld [vmem:[%s1 + $0x134] sm:$0xf]
      %v363 = vld [vmem:[%s1 + $0x138] sm:$0xf]
      %v364 = vld [vmem:[%s1 + $0x13c] sm:$0xf]
      %v365 = vld [vmem:[%s1 + $0x140] sm:$0xf]
      %v366 = vld [vmem:[%s1 + $0x144] sm:$0xf]
      %v367 = vld [vmem:[%s1 + $0x148] sm:$0xf]
      %v368 = vld [vmem:[%s1 + $0x14c] sm:$0xf]
      %v369 = vld [vmem:[%s1 + $0x150] sm:$0xf]
      %v370 = vld [vmem:[%s1 + $0x154] sm:$0xf]
      %v371 = vld [vmem:[%s1 + $0x158] sm:$0xf]
      %v372 = vld [vmem:[%s1 + $0x15c] sm:$0xf]
      %v373 = vld [vmem:[%s1 + $0x160] sm:$0xf]
      %v374 = vld [vmem:[%s1 + $0x164] sm:$0xf]
      %v375 = vld [vmem:[%s1 + $0x168] sm:$0xf]
      %v376 = vld [vmem:[%s1 + $0x16c] sm:$0xf]
      %v377 = vld [vmem:[%s1 + $0x170] sm:$0xf]
      %v378 = vld [vmem:[%s1 + $0x174] sm:$0xf]
      %v379 = vld [vmem:[%s1 + $0x178] sm:$0xf]
      %v380 = vld [vmem:[%s1 + $0x17c] sm:$0xf]
      %v381 = vld [vmem:[%s1 + $0x180] sm:$0xf]
      %v382 = vld [vmem:[%s1 + $0x184] sm:$0xf]
      %v383 = vld [vmem:[%s1 + $0x188] sm:$0xf]
      %v384 = vld [vmem:[%s1 + $0x18c] sm:$0xf]
      %v385 = vld [vmem:[%s1 + $0x190] sm:$0xf]
      %v386 = vld [vmem:[%s1 + $0x194] sm:$0xf]
      %v387 = vld [vmem:[%s1 + $0x198] sm:$0xf]
      %v388 = vld [vmem:[%s1 + $0x19c] sm:$0xf]
      %v389 = vld [vmem:[%s1 + $0x1a0] sm:$0xf]
      %v390 = vld [vmem:[%s1 + $0x1a4] sm:$0xf]
      %v391 = vld [vmem:[%s1 + $0x1a8] sm:$0xf]
      %v392 = vld [vmem:[%s1 + $0x1ac] sm:$0xf]
      %v393 = vld [vmem:[%s1 + $0x1b0] sm:$0xf]
      %v394 = vld [vmem:[%s1 + $0x1b4] sm:$0xf]
      %v395 = vld [vmem:[%s1 + $0x1b8] sm:$0xf]
      %v396 = vld [vmem:[%s1 + $0x1bc] sm:$0xf]
      %v397 = vld [vmem:[%s1 + $0x1c0] sm:$0xf]
      %v398 = vld [vmem:[%s1 + $0x1c4] sm:$0xf]
      %v399 = vld [vmem:[%s1 + $0x1c8] sm:$0xf]
      %v400 = vld [vmem:[%s1 + $0x1cc] sm:$0xf]
      %v401 = vld [vmem:[%s1 + $0x1d0] sm:$0xf]
      %v402 = vld [vmem:[%s1 + $0x1d4] sm:$0xf]
      %v403 = vld [vmem:[%s1 + $0x1d8] sm:$0xf]
      %v404 = vld [vmem:[%s1 + $0x1dc] sm:$0xf]
      %v405 = vld [vmem:[%s1 + $0x1e0] sm:$0xf]
      %v406 = vld [vmem:[%s1 + $0x1e4] sm:$0xf]
      %v407 = vld [vmem:[%s1 + $0x1e8] sm:$0xf]
      %v408 = vld [vmem:[%s1 + $0x1ec] sm:$0xf]
      %v409 = vld [vmem:[%s1 + $0x1f0] sm:$0xf]
      %v410 = vld [vmem:[%s1 + $0x1f4] sm:$0xf]
      %v411 = vld [vmem:[%s1 + $0x1f8] sm:$0xf]
      %v412 = vld [vmem:[%s1 + $0x1fc] sm:$0xf]
      %v441 = vunpack.c.l.b16 %v257
      %v442 = vunpack.c.h.b16 %v257
      %v443 = vunpack.c.l.b16 %v258
      %v444 = vunpack.c.h.b16 %v258
      %v445 = vunpack.c.l.b16 %v259
      %v446 = vunpack.c.h.b16 %v259
      %v447 = vunpack.c.l.b16 %v260
      %v448 = vunpack.c.h.b16 %v260
      %v449 = vunpack.c.l.b16 %v261
      %v450 = vunpack.c.h.b16 %v261
      %v451 = vunpack.c.l.b16 %v262
      %v452 = vunpack.c.h.b16 %v262
      %v453 = vunpack.c.l.b16 %v263
      %v454 = vunpack.c.h.b16 %v263
      %v455 = vunpack.c.l.b16 %v264
      %v456 = vunpack.c.h.b16 %v264
      %v457 = vunpack.c.l.b16 %v265
      %v458 = vunpack.c.h.b16 %v265
      %v459 = vunpack.c.l.b16 %v266
      %v460 = vunpack.c.h.b16 %v266
      %v461 = vunpack.c.l.b16 %v267
      %v462 = vunpack.c.h.b16 %v267
      %v463 = vunpack.c.l.b16 %v268
      %v464 = vunpack.c.h.b16 %v268
      %v465 = vunpack.c.l.b16 %v269
      %v466 = vunpack.c.h.b16 %v269
      %v467 = vunpack.c.l.b16 %v270
      %v468 = vunpack.c.h.b16 %v270
      %v469 = vunpack.c.l.b16 %v271
      %v470 = vunpack.c.h.b16 %v271
      %v471 = vunpack.c.l.b16 %v272
      %v472 = vunpack.c.h.b16 %v272
      %v473 = vunpack.c.l.b16 %v273
      %v474 = vunpack.c.h.b16 %v273
      %v475 = vunpack.c.l.b16 %v274
      %v476 = vunpack.c.h.b16 %v274
      %v477 = vunpack.c.l.b16 %v275
      %v478 = vunpack.c.h.b16 %v275
      %v479 = vunpack.c.l.b16 %v276
      %v480 = vunpack.c.h.b16 %v276
      %v481 = vunpack.c.l.b16 %v277
      %v482 = vunpack.c.h.b16 %v277
      %v483 = vunpack.c.l.b16 %v278
      %v484 = vunpack.c.h.b16 %v278
      %v485 = vunpack.c.l.b16 %v279
      %v486 = vunpack.c.h.b16 %v279
      %v487 = vunpack.c.l.b16 %v280
      %v488 = vunpack.c.h.b16 %v280
      %v489 = vunpack.c.l.b16 %v281
      %v490 = vunpack.c.h.b16 %v281
      %v491 = vunpack.c.l.b16 %v282
      %v492 = vunpack.c.h.b16 %v282
      %v493 = vunpack.c.l.b16 %v283
      %v494 = vunpack.c.h.b16 %v283
      %v495 = vunpack.c.l.b16 %v284
      %v496 = vunpack.c.h.b16 %v284
      %v497 = vpack.c.b16 %v449, %v441
      %v498 = vpack.c.b16 %v450, %v442
      %v499 = vpack.c.b16 %v451, %v443
      %v500 = vpack.c.b16 %v452, %v444
      %v501 = vpack.c.b16 %v453, %v445
      %v502 = vpack.c.b16 %v454, %v446
      %v503 = vpack.c.b16 %v455, %v447
      %v504 = vpack.c.b16 %v456, %v448
      %v505 = vpack.c.b16 %v465, %v457
      %v506 = vpack.c.b16 %v466, %v458
      %v507 = vpack.c.b16 %v467, %v459
      %v508 = vpack.c.b16 %v468, %v460
      %v509 = vpack.c.b16 %v469, %v461
      %v510 = vpack.c.b16 %v470, %v462
      %v511 = vpack.c.b16 %v471, %v463
      %v512 = vpack.c.b16 %v472, %v464
      %v513 = vpack.c.b16 %v481, %v473
      %v514 = vpack.c.b16 %v482, %v474
      %v515 = vpack.c.b16 %v483, %v475
      %v516 = vpack.c.b16 %v484, %v476
      %v517 = vpack.c.b16 %v485, %v477
      %v518 = vpack.c.b16 %v486, %v478
      %v519 = vpack.c.b16 %v487, %v479
      %v520 = vpack.c.b16 %v488, %v480
      %v521 = vpack.c.b16 %v489, %v489
      %v522 = vpack.c.b16 %v490, %v490
      %v523 = vpack.c.b16 %v491, %v491
      %v524 = vpack.c.b16 %v492, %v492
      %v525 = vpack.c.b16 %v493, %v493
      %v526 = vpack.c.b16 %v494, %v494
      %v527 = vpack.c.b16 %v495, %v495
      %v528 = vpack.c.b16 %v496, %v496
      %v689 = vunpack.c.l.b16 %v285
      %v690 = vunpack.c.l.b16 %v286
      %v691 = vunpack.c.l.b16 %v287
      %v692 = vunpack.c.l.b16 %v288
      %v693 = vunpack.c.l.b16 %v289
      %v694 = vunpack.c.l.b16 %v290
      %v695 = vunpack.c.l.b16 %v291
      %v696 = vunpack.c.l.b16 %v292
      %v697 = vunpack.c.l.b16 %v293
      %v698 = vunpack.c.l.b16 %v294
      %v699 = vunpack.c.l.b16 %v295
      %v700 = vunpack.c.l.b16 %v296
      %v701 = vunpack.c.l.b16 %v297
      %v702 = vunpack.c.l.b16 %v298
      %v703 = vunpack.c.l.b16 %v299
      %v704 = vunpack.c.l.b16 %v300
      %v705 = vunpack.c.l.b16 %v301
      %v706 = vunpack.c.l.b16 %v302
      %v707 = vunpack.c.l.b16 %v303
      %v708 = vunpack.c.l.b16 %v304
      %v709 = vunpack.c.l.b16 %v305
      %v710 = vunpack.c.l.b16 %v306
      %v711 = vunpack.c.l.b16 %v307
      %v712 = vunpack.c.l.b16 %v308
      %v713 = vunpack.c.l.b16 %v309
      %v714 = vunpack.c.l.b16 %v310
      %v715 = vunpack.c.l.b16 %v311
      %v716 = vunpack.c.l.b16 %v312
      %v717 = vunpack.c.l.b16 %v313
      %v718 = vunpack.c.l.b16 %v314
      %v719 = vunpack.c.l.b16 %v315
      %v720 = vunpack.c.l.b16 %v316
      %v721 = vunpack.c.l.b16 %v317
      %v722 = vunpack.c.l.b16 %v318
      %v723 = vunpack.c.l.b16 %v319
      %v724 = vunpack.c.l.b16 %v320
      %v725 = vunpack.c.l.b16 %v321
      %v726 = vunpack.c.l.b16 %v322
      %v727 = vunpack.c.l.b16 %v323
      %v728 = vunpack.c.l.b16 %v324
      %v729 = vunpack.c.l.b16 %v325
      %v730 = vunpack.c.l.b16 %v326
      %v731 = vunpack.c.l.b16 %v327
      %v732 = vunpack.c.l.b16 %v328
      %v733 = vunpack.c.l.b16 %v329
      %v734 = vunpack.c.l.b16 %v330
      %v735 = vunpack.c.l.b16 %v331
      %v736 = vunpack.c.l.b16 %v332
      %v737 = vunpack.c.l.b16 %v333
      %v738 = vunpack.c.l.b16 %v334
      %v739 = vunpack.c.l.b16 %v335
      %v740 = vunpack.c.l.b16 %v336
      %v741 = vunpack.c.l.b16 %v337
      %v742 = vunpack.c.l.b16 %v338
      %v743 = vunpack.c.l.b16 %v339
      %v744 = vunpack.c.l.b16 %v340
      %v745 = vunpack.c.l.b16 %v341
      %v746 = vunpack.c.l.b16 %v342
      %v747 = vunpack.c.l.b16 %v343
      %v748 = vunpack.c.l.b16 %v344
      %v749 = vunpack.c.l.b16 %v345
      %v750 = vunpack.c.l.b16 %v346
      %v751 = vunpack.c.l.b16 %v347
      %v752 = vunpack.c.l.b16 %v348
      %v753 = vunpack.c.l.b16 %v349
      %v754 = vunpack.c.l.b16 %v350
      %v755 = vunpack.c.l.b16 %v351
      %v756 = vunpack.c.l.b16 %v352
      %v757 = vunpack.c.l.b16 %v353
      %v758 = vunpack.c.l.b16 %v354
      %v759 = vunpack.c.l.b16 %v355
      %v760 = vunpack.c.l.b16 %v356
      %v761 = vunpack.c.l.b16 %v357
      %v762 = vunpack.c.l.b16 %v358
      %v763 = vunpack.c.l.b16 %v359
      %v764 = vunpack.c.l.b16 %v360
      %v765 = vunpack.c.l.b16 %v361
      %v766 = vunpack.c.l.b16 %v362
      %v767 = vunpack.c.l.b16 %v363
      %v768 = vunpack.c.l.b16 %v364
      %v769 = vunpack.c.l.b16 %v365
      %v770 = vunpack.c.l.b16 %v366
      %v771 = vunpack.c.l.b16 %v367
      %v772 = vunpack.c.l.b16 %v368
      %v773 = vunpack.c.l.b16 %v369
      %v774 = vunpack.c.l.b16 %v370
      %v775 = vunpack.c.l.b16 %v371
      %v776 = vunpack.c.l.b16 %v372
      %v777 = vunpack.c.l.b16 %v373
      %v778 = vunpack.c.l.b16 %v374
      %v779 = vunpack.c.l.b16 %v375
      %v780 = vunpack.c.l.b16 %v376
      %v781 = vunpack.c.l.b16 %v377
      %v782 = vunpack.c.l.b16 %v378
      %v783 = vunpack.c.l.b16 %v379
      %v784 = vunpack.c.l.b16 %v380
      %v785 = vunpack.c.l.b16 %v381
      %v786 = vunpack.c.l.b16 %v382
      %v787 = vunpack.c.l.b16 %v383
      %v788 = vunpack.c.l.b16 %v384
      %v789 = vunpack.c.l.b16 %v385
      %v790 = vunpack.c.l.b16 %v386
      %v791 = vunpack.c.l.b16 %v387
      %v792 = vunpack.c.l.b16 %v388
      %v793 = vunpack.c.l.b16 %v389
      %v794 = vunpack.c.l.b16 %v390
      %v795 = vunpack.c.l.b16 %v391
      %v796 = vunpack.c.l.b16 %v392
      %v797 = vunpack.c.l.b16 %v393
      %v798 = vunpack.c.l.b16 %v394
      %v799 = vunpack.c.l.b16 %v395
      %v800 = vunpack.c.l.b16 %v396
      %v801 = vunpack.c.l.b16 %v397
      %v802 = vunpack.c.l.b16 %v398
      %v803 = vunpack.c.l.b16 %v399
      %v804 = vunpack.c.l.b16 %v400
      %v805 = vunpack.c.l.b16 %v401
      %v806 = vunpack.c.l.b16 %v402
      %v807 = vunpack.c.l.b16 %v403
      %v808 = vunpack.c.l.b16 %v404
      %v809 = vunpack.c.l.b16 %v405
      %v810 = vunpack.c.l.b16 %v406
      %v811 = vunpack.c.l.b16 %v407
      %v812 = vunpack.c.l.b16 %v408
      %v813 = vunpack.c.l.b16 %v409
      %v814 = vunpack.c.l.b16 %v410
      %v815 = vunpack.c.l.b16 %v411
      %v816 = vunpack.c.l.b16 %v412
      %v817 = vpack.c.b16 %v690, %v689
      %v818 = vpack.c.b16 %v692, %v691
      %v819 = vpack.c.b16 %v694, %v693
      %v820 = vpack.c.b16 %v696, %v695
      %v821 = vpack.c.b16 %v698, %v697
      %v822 = vpack.c.b16 %v700, %v699
      %v823 = vpack.c.b16 %v702, %v701
      %v824 = vpack.c.b16 %v704, %v703
      %v825 = vpack.c.b16 %v706, %v705
      %v826 = vpack.c.b16 %v708, %v707
      %v827 = vpack.c.b16 %v710, %v709
      %v828 = vpack.c.b16 %v712, %v711
      %v829 = vpack.c.b16 %v714, %v713
      %v830 = vpack.c.b16 %v716, %v715
      %v831 = vpack.c.b16 %v718, %v717
      %v832 = vpack.c.b16 %v720, %v719
      %v833 = vpack.c.b16 %v722, %v721
      %v834 = vpack.c.b16 %v724, %v723
      %v835 = vpack.c.b16 %v726, %v725
      %v836 = vpack.c.b16 %v728, %v727
      %v837 = vpack.c.b16 %v730, %v729
      %v838 = vpack.c.b16 %v732, %v731
      %v839 = vpack.c.b16 %v734, %v733
      %v840 = vpack.c.b16 %v736, %v735
      %v841 = vpack.c.b16 %v738, %v737
      %v842 = vpack.c.b16 %v740, %v739
      %v843 = vpack.c.b16 %v742, %v741
      %v844 = vpack.c.b16 %v744, %v743
      %v845 = vpack.c.b16 %v746, %v745
      %v846 = vpack.c.b16 %v748, %v747
      %v847 = vpack.c.b16 %v750, %v749
      %v848 = vpack.c.b16 %v752, %v751
      %v849 = vpack.c.b16 %v754, %v753
      %v850 = vpack.c.b16 %v756, %v755
      %v851 = vpack.c.b16 %v758, %v757
      %v852 = vpack.c.b16 %v760, %v759
      %v853 = vpack.c.b16 %v762, %v761
      %v854 = vpack.c.b16 %v764, %v763
      %v855 = vpack.c.b16 %v766, %v765
      %v856 = vpack.c.b16 %v768, %v767
      %v857 = vpack.c.b16 %v770, %v769
      %v858 = vpack.c.b16 %v772, %v771
      %v859 = vpack.c.b16 %v774, %v773
      %v860 = vpack.c.b16 %v776, %v775
      %v861 = vpack.c.b16 %v778, %v777
      %v862 = vpack.c.b16 %v780, %v779
      %v863 = vpack.c.b16 %v782, %v781
      %v864 = vpack.c.b16 %v784, %v783
      %v865 = vpack.c.b16 %v786, %v785
      %v866 = vpack.c.b16 %v788, %v787
      %v867 = vpack.c.b16 %v790, %v789
      %v868 = vpack.c.b16 %v792, %v791
      %v869 = vpack.c.b16 %v794, %v793
      %v870 = vpack.c.b16 %v796, %v795
      %v871 = vpack.c.b16 %v798, %v797
      %v872 = vpack.c.b16 %v800, %v799
      %v873 = vpack.c.b16 %v802, %v801
      %v874 = vpack.c.b16 %v804, %v803
      %v875 = vpack.c.b16 %v806, %v805
      %v876 = vpack.c.b16 %v808, %v807
      %v877 = vpack.c.b16 %v810, %v809
      %v878 = vpack.c.b16 %v812, %v811
      %v879 = vpack.c.b16 %v814, %v813
      %v880 = vpack.c.b16 %v816, %v815
      %945 = vmatpush.bf16.msra.mxu0 %v824
      %946 = vmatpush.bf16.msra.mxu0 %v823
      %947 = vmatpush.bf16.msra.mxu0 %v822
      %948 = vmatpush.bf16.msra.mxu0 %v821
      %949 = vmatpush.bf16.msra.mxu0 %v820
      %950 = vmatpush.bf16.msra.mxu0 %v819
      %951 = vmatpush.bf16.msra.mxu0 %v818
      %952 = vmatpush.bf16.msra.mxu0 %v817
      %953 = vmatmul.bf16.gmra.mxu0 %v497
      %v954 = vpop.f32.mrf.mxu0
      %v955 = vadd.f32 0.0, %v954
      %v956 = vpop.f32.mrf.mxu0
      %v957 = vadd.f32 0.0, %v956
      %958 = vmatmul.bf16.gmra.mxu0 %v505
      %v959 = vpop.f32.mrf.mxu0
      %v960 = vadd.f32 0.0, %v959
      %v961 = vpop.f32.mrf.mxu0
      %v962 = vadd.f32 0.0, %v961
      %963 = vmatmul.bf16.gmra.mxu0 %v513
      %v964 = vpop.f32.mrf.mxu0
      %v965 = vadd.f32 0.0, %v964
      %v966 = vpop.f32.mrf.mxu0
      %v967 = vadd.f32 0.0, %v966
      %968 = vmatmul.bf16.gmra.mxu0 %v521
      %v969 = vpop.f32.mrf.mxu0
      %v970 = vadd.f32 0.0, %v969
      %v971 = vpop.f32.mrf.mxu0
      %972 = vdwg.mxu0
      %973 = vmatpush.bf16.msra.mxu0 %v832
      %974 = vmatpush.bf16.msra.mxu0 %v831
      %975 = vmatpush.bf16.msra.mxu0 %v830
      %976 = vmatpush.bf16.msra.mxu0 %v829
      %977 = vmatpush.bf16.msra.mxu0 %v828
      %978 = vmatpush.bf16.msra.mxu0 %v827
      %979 = vmatpush.bf16.msra.mxu0 %v826
      %980 = vmatpush.bf16.msra.mxu0 %v825
      %981 = vmatmul.bf16.gmra.mxu0 %v498
      %v982 = vpop.f32.mrf.mxu0
      %v983 = vadd.f32 %v955, %v982
      %v984 = vpop.f32.mrf.mxu0
      %v985 = vadd.f32 %v957, %v984
      %986 = vmatmul.bf16.gmra.mxu0 %v506
      %v987 = vpop.f32.mrf.mxu0
      %v988 = vadd.f32 %v960, %v987
      %v989 = vpop.f32.mrf.mxu0
      %v990 = vadd.f32 %v962, %v989
      %991 = vmatmul.bf16.gmra.mxu0 %v514
      %v992 = vpop.f32.mrf.mxu0
      %v993 = vadd.f32 %v965, %v992
      %v994 = vpop.f32.mrf.mxu0
      %v995 = vadd.f32 %v967, %v994
      %996 = vmatmul.bf16.gmra.mxu0 %v522
      %v997 = vpop.f32.mrf.mxu0
      %v998 = vadd.f32 %v970, %v997
      %v999 = vpop.f32.mrf.mxu0
      %1000 = vdwg.mxu0
      %1001 = vmatpush.bf16.msra.mxu0 %v840
      %1002 = vmatpush.bf16.msra.mxu0 %v839
      %1003 = vmatpush.bf16.msra.mxu0 %v838
      %1004 = vmatpush.bf16.msra.mxu0 %v837
      %1005 = vmatpush.bf16.msra.mxu0 %v836
      %1006 = vmatpush.bf16.msra.mxu0 %v835
      %1007 = vmatpush.bf16.msra.mxu0 %v834
      %1008 = vmatpush.bf16.msra.mxu0 %v833
      %1009 = vmatmul.bf16.gmra.mxu0 %v499
      %v1010 = vpop.f32.mrf.mxu0
      %v1011 = vadd.f32 %v983, %v1010
      %v1012 = vpop.f32.mrf.mxu0
      %v1013 = vadd.f32 %v985, %v1012
      %1014 = vmatmul.bf16.gmra.mxu0 %v507
      %v1015 = vpop.f32.mrf.mxu0
      %v1016 = vadd.f32 %v988, %v1015
      %v1017 = vpop.f32.mrf.mxu0
      %v1018 = vadd.f32 %v990, %v1017
      %1019 = vmatmul.bf16.gmra.mxu0 %v515
      %v1020 = vpop.f32.mrf.mxu0
      %v1021 = vadd.f32 %v993, %v1020
      %v1022 = vpop.f32.mrf.mxu0
      %v1023 = vadd.f32 %v995, %v1022
      %1024 = vmatmul.bf16.gmra.mxu0 %v523
      %v1025 = vpop.f32.mrf.mxu0
      %v1026 = vadd.f32 %v998, %v1025
      %v1027 = vpop.f32.mrf.mxu0
      %1028 = vdwg.mxu0
      %1029 = vmatpush.bf16.msra.mxu0 %v848
      %1030 = vmatpush.bf16.msra.mxu0 %v847
      %1031 = vmatpush.bf16.msra.mxu0 %v846
      %1032 = vmatpush.bf16.msra.mxu0 %v845
      %1033 = vmatpush.bf16.msra.mxu0 %v844
      %1034 = vmatpush.bf16.msra.mxu0 %v843
      %1035 = vmatpush.bf16.msra.mxu0 %v842
      %1036 = vmatpush.bf16.msra.mxu0 %v841
      %1037 = vmatmul.bf16.gmra.mxu0 %v500
      %v1038 = vpop.f32.mrf.mxu0
      %v1039 = vadd.f32 %v1011, %v1038
      %v1040 = vpop.f32.mrf.mxu0
      %v1041 = vadd.f32 %v1013, %v1040
      %1042 = vmatmul.bf16.gmra.mxu0 %v508
      %v1043 = vpop.f32.mrf.mxu0
      %v1044 = vadd.f32 %v1016, %v1043
      %v1045 = vpop.f32.mrf.mxu0
      %v1046 = vadd.f32 %v1018, %v1045
      %1047 = vmatmul.bf16.gmra.mxu0 %v516
      %v1048 = vpop.f32.mrf.mxu0
      %v1049 = vadd.f32 %v1021, %v1048
      %v1050 = vpop.f32.mrf.mxu0
      %v1051 = vadd.f32 %v1023, %v1050
      %1052 = vmatmul.bf16.gmra.mxu0 %v524
      %v1053 = vpop.f32.mrf.mxu0
      %v1054 = vadd.f32 %v1026, %v1053
      %v1055 = vpop.f32.mrf.mxu0
      %1056 = vdwg.mxu0
      %1057 = vmatpush.bf16.msra.mxu0 %v856
      %1058 = vmatpush.bf16.msra.mxu0 %v855
      %1059 = vmatpush.bf16.msra.mxu0 %v854
      %1060 = vmatpush.bf16.msra.mxu0 %v853
      %1061 = vmatpush.bf16.msra.mxu0 %v852
      %1062 = vmatpush.bf16.msra.mxu0 %v851
      %1063 = vmatpush.bf16.msra.mxu0 %v850
      %1064 = vmatpush.bf16.msra.mxu0 %v849
      %1065 = vmatmul.bf16.gmra.mxu0 %v501
      %v1066 = vpop.f32.mrf.mxu0
      %v1067 = vadd.f32 %v1039, %v1066
      %v1068 = vpop.f32.mrf.mxu0
      %v1069 = vadd.f32 %v1041, %v1068
      %1070 = vmatmul.bf16.gmra.mxu0 %v509
      %v1071 = vpop.f32.mrf.mxu0
      %v1072 = vadd.f32 %v1044, %v1071
      %v1073 = vpop.f32.mrf.mxu0
      %v1074 = vadd.f32 %v1046, %v1073
      %1075 = vmatmul.bf16.gmra.mxu0 %v517
      %v1076 = vpop.f32.mrf.mxu0
      %v1077 = vadd.f32 %v1049, %v1076
      %v1078 = vpop.f32.mrf.mxu0
      %v1079 = vadd.f32 %v1051, %v1078
      %1080 = vmatmul.bf16.gmra.mxu0 %v525
      %v1081 = vpop.f32.mrf.mxu0
      %v1082 = vadd.f32 %v1054, %v1081
      %v1083 = vpop.f32.mrf.mxu0
      %1084 = vdwg.mxu0
      %1085 = vmatpush.bf16.msra.mxu0 %v864
      %1086 = vmatpush.bf16.msra.mxu0 %v863
      %1087 = vmatpush.bf16.msra.mxu0 %v862
      %1088 = vmatpush.bf16.msra.mxu0 %v861
      %1089 = vmatpush.bf16.msra.mxu0 %v860
      %1090 = vmatpush.bf16.msra.mxu0 %v859
      %1091 = vmatpush.bf16.msra.mxu0 %v858
      %1092 = vmatpush.bf16.msra.mxu0 %v857
      %1093 = vmatmul.bf16.gmra.mxu0 %v502
      %v1094 = vpop.f32.mrf.mxu0
      %v1095 = vadd.f32 %v1067, %v1094
      %v1096 = vpop.f32.mrf.mxu0
      %v1097 = vadd.f32 %v1069, %v1096
      %1098 = vmatmul.bf16.gmra.mxu0 %v510
      %v1099 = vpop.f32.mrf.mxu0
      %v1100 = vadd.f32 %v1072, %v1099
      %v1101 = vpop.f32.mrf.mxu0
      %v1102 = vadd.f32 %v1074, %v1101
      %1103 = vmatmul.bf16.gmra.mxu0 %v518
      %v1104 = vpop.f32.mrf.mxu0
      %v1105 = vadd.f32 %v1077, %v1104
      %v1106 = vpop.f32.mrf.mxu0
      %v1107 = vadd.f32 %v1079, %v1106
      %1108 = vmatmul.bf16.gmra.mxu0 %v526
      %v1109 = vpop.f32.mrf.mxu0
      %v1110 = vadd.f32 %v1082, %v1109
      %v1111 = vpop.f32.mrf.mxu0
      %1112 = vdwg.mxu0
      %1113 = vmatpush.bf16.msra.mxu0 %v872
      %1114 = vmatpush.bf16.msra.mxu0 %v871
      %1115 = vmatpush.bf16.msra.mxu0 %v870
      %1116 = vmatpush.bf16.msra.mxu0 %v869
      %1117 = vmatpush.bf16.msra.mxu0 %v868
      %1118 = vmatpush.bf16.msra.mxu0 %v867
      %1119 = vmatpush.bf16.msra.mxu0 %v866
      %1120 = vmatpush.bf16.msra.mxu0 %v865
      %1121 = vmatmul.bf16.gmra.mxu0 %v503
      %v1122 = vpop.f32.mrf.mxu0
      %v1123 = vadd.f32 %v1095, %v1122
      %v1124 = vpop.f32.mrf.mxu0
      %v1125 = vadd.f32 %v1097, %v1124
      %1126 = vmatmul.bf16.gmra.mxu0 %v511
      %v1127 = vpop.f32.mrf.mxu0
      %v1128 = vadd.f32 %v1100, %v1127
      %v1129 = vpop.f32.mrf.mxu0
      %v1130 = vadd.f32 %v1102, %v1129
      %1131 = vmatmul.bf16.gmra.mxu0 %v519
      %v1132 = vpop.f32.mrf.mxu0
      %v1133 = vadd.f32 %v1105, %v1132
      %v1134 = vpop.f32.mrf.mxu0
      %v1135 = vadd.f32 %v1107, %v1134
      %1136 = vmatmul.bf16.gmra.mxu0 %v527
      %v1137 = vpop.f32.mrf.mxu0
      %v1138 = vadd.f32 %v1110, %v1137
      %v1139 = vpop.f32.mrf.mxu0
      %1140 = vdwg.mxu0
      %1141 = vmatpush.bf16.msra.mxu0 %v880
      %1142 = vmatpush.bf16.msra.mxu0 %v879
      %1143 = vmatpush.bf16.msra.mxu0 %v878
      %1144 = vmatpush.bf16.msra.mxu0 %v877
      %1145 = vmatpush.bf16.msra.mxu0 %v876
      %1146 = vmatpush.bf16.msra.mxu0 %v875
      %1147 = vmatpush.bf16.msra.mxu0 %v874
      %1148 = vmatpush.bf16.msra.mxu0 %v873
      %1149 = vmatmul.bf16.gmra.mxu0 %v504
      %v1150 = vpop.f32.mrf.mxu0
      %v1151 = vadd.f32 %v1123, %v1150
      %v1152 = vpop.f32.mrf.mxu0
      %v1153 = vadd.f32 %v1125, %v1152
      %1154 = vmatmul.bf16.gmra.mxu0 %v512
      %v1155 = vpop.f32.mrf.mxu0
      %v1156 = vadd.f32 %v1128, %v1155
      %v1157 = vpop.f32.mrf.mxu0
      %v1158 = vadd.f32 %v1130, %v1157
      %1159 = vmatmul.bf16.gmra.mxu0 %v520
      %v1160 = vpop.f32.mrf.mxu0
      %v1161 = vadd.f32 %v1133, %v1160
      %v1162 = vpop.f32.mrf.mxu0
      %v1163 = vadd.f32 %v1135, %v1162
      %1164 = vmatmul.bf16.gmra.mxu0 %v528
      %v1165 = vpop.f32.mrf.mxu0
      %v1166 = vadd.f32 %v1138, %v1165
      %v1167 = vpop.f32.mrf.mxu0
      %1168 = vdwg.mxu0
      %v1169 = vmul.f32 %v1151, %v1151
      %v1170 = vmul.f32 %v1153, %v1153
      %v1171 = vmul.f32 %v1156, %v1156
      %v1172 = vmul.f32 %v1158, %v1158
      %v1173 = vmul.f32 %v1161, %v1161
      %v1174 = vmul.f32 %v1163, %v1163
      %v1175 = vmul.f32 %v1166, %v1166
      %v1176 = vmul.f32 %v1169, 0.035677407
      %v1177 = vmul.f32 %v1170, 0.035677407
      %v1178 = vmul.f32 %v1171, 0.035677407
      %v1179 = vmul.f32 %v1172, 0.035677407
      %v1180 = vmul.f32 %v1173, 0.035677407
      %v1181 = vmul.f32 %v1174, 0.035677407
      %v1182 = vmul.f32 %v1175, 0.035677407
      %v1183 = vadd.f32 %v1176, 0.7978846
      %v1184 = vadd.f32 %v1177, 0.7978846
      %v1185 = vadd.f32 %v1178, 0.7978846
      %v1186 = vadd.f32 %v1179, 0.7978846
      %v1187 = vadd.f32 %v1180, 0.7978846
      %v1188 = vadd.f32 %v1181, 0.7978846
      %v1189 = vadd.f32 %v1182, 0.7978846
      %v1190 = vmul.f32 %v1151, %v1183
      %v1191 = vmul.f32 %v1153, %v1184
      %v1192 = vmul.f32 %v1156, %v1185
      %v1193 = vmul.f32 %v1158, %v1186
      %v1194 = vmul.f32 %v1161, %v1187
      %v1195 = vmul.f32 %v1163, %v1188
      %v1196 = vmul.f32 %v1166, %v1189
      %v1197 = vmul.f32 %v1151, 0.5
      %v1198 = vmul.f32 %v1153, 0.5
      %v1199 = vmul.f32 %v1156, 0.5
      %v1200 = vmul.f32 %v1158, 0.5
      %v1201 = vmul.f32 %v1161, 0.5
      %v1202 = vmul.f32 %v1163, 0.5
      %v1203 = vmul.f32 %v1166, 0.5
      %v1204 = vtanh.pop %v1190
      %v1205 = vtanh.pop %v1191
      %v1206 = vtanh.pop %v1192
      %v1207 = vtanh.pop %v1193
      %v1208 = vtanh.pop %v1194
      %v1209 = vtanh.pop %v1195
      %v1210 = vtanh.pop %v1196
      %v1211 = vadd.f32 %v1204, 1.0
      %v1212 = vadd.f32 %v1205, 1.0
      %v1213 = vadd.f32 %v1206, 1.0
      %v1214 = vadd.f32 %v1207, 1.0
      %v1215 = vadd.f32 %v1208, 1.0
      %v1216 = vadd.f32 %v1209, 1.0
      %v1217 = vadd.f32 %v1210, 1.0
      %v1218 = vmul.f32 %v1197, %v1211
      %v1219 = vmul.f32 %v1198, %v1212
      %v1220 = vmul.f32 %v1199, %v1213
      %v1221 = vmul.f32 %v1200, %v1214
      %v1222 = vmul.f32 %v1201, %v1215
      %v1223 = vmul.f32 %v1202, %v1216
      %v1224 = vmul.f32 %v1203, %v1217
      %v1225 = vpack.c.bf16 %v1218, %v1218
      %v1226 = vpack.c.bf16 %v1219, %v1219
      %v1227 = vpack.c.bf16 %v1220, %v1220
      %v1228 = vpack.c.bf16 %v1221, %v1221
      %v1229 = vpack.c.bf16 %v1222, %v1222
      %v1230 = vpack.c.bf16 %v1223, %v1223
      %v1231 = vpack.c.bf16 %v1224, %v1224
      %v1232 = vld [vmem:[#allocation2] sm:$0xff]
      %v1233 = vld [vmem:[%s246] sm:$0xf]
      %v1234 = vld [vmem:[%s246 + $0x4] sm:$0xf]
      %v1235 = vld [vmem:[%s246 + $0x8] sm:$0xf]
      %v1236 = vld [vmem:[%s246 + $0xc] sm:$0xf]
      %v1237 = vld [vmem:[%s246 + $0x10] sm:$0xf]
      %v1238 = vld [vmem:[%s246 + $0x14] sm:$0xf]
      %v1239 = vld [vmem:[%s246 + $0x18] sm:$0xf]
      %v1240 = vld [vmem:[%s246 + $0x1c] sm:$0xf]
      %v1241 = vld [vmem:[%s246 + $0x20] sm:$0xf]
      %v1242 = vld [vmem:[%s246 + $0x24] sm:$0xf]
      %v1243 = vld [vmem:[%s246 + $0x28] sm:$0xf]
      %v1244 = vld [vmem:[%s246 + $0x2c] sm:$0xf]
      %v1245 = vld [vmem:[%s246 + $0x30] sm:$0xf]
      %v1246 = vld [vmem:[%s246 + $0x34] sm:$0xf]
      %v1247 = vld [vmem:[%s246 + $0x38] sm:$0xf]
      %v1248 = vld [vmem:[%s246 + $0x3c] sm:$0xf]
      %v1265 = vunpack.c.l.b16 %v1233
      %v1266 = vunpack.c.l.b16 %v1234
      %v1267 = vunpack.c.l.b16 %v1235
      %v1268 = vunpack.c.l.b16 %v1236
      %v1269 = vunpack.c.l.b16 %v1237
      %v1270 = vunpack.c.l.b16 %v1238
      %v1271 = vunpack.c.l.b16 %v1239
      %v1272 = vunpack.c.l.b16 %v1240
      %v1273 = vunpack.c.l.b16 %v1241
      %v1274 = vunpack.c.l.b16 %v1242
      %v1275 = vunpack.c.l.b16 %v1243
      %v1276 = vunpack.c.l.b16 %v1244
      %v1277 = vunpack.c.l.b16 %v1245
      %v1278 = vunpack.c.l.b16 %v1246
      %v1279 = vunpack.c.l.b16 %v1247
      %v1280 = vunpack.c.l.b16 %v1248
      %v1281 = vpack.c.b16 %v1266, %v1265
      %v1282 = vpack.c.b16 %v1268, %v1267
      %v1283 = vpack.c.b16 %v1270, %v1269
      %v1284 = vpack.c.b16 %v1272, %v1271
      %v1285 = vpack.c.b16 %v1274, %v1273
      %v1286 = vpack.c.b16 %v1276, %v1275
      %v1287 = vpack.c.b16 %v1278, %v1277
      %v1288 = vpack.c.b16 %v1280, %v1279
      %1297 = vmatpush.bf16.msra.mxu0 %v1288
      %1298 = vmatpush.bf16.msra.mxu0 %v1287
      %1299 = vmatpush.bf16.msra.mxu0 %v1286
      %1300 = vmatpush.bf16.msra.mxu0 %v1285
      %1301 = vmatpush.bf16.msra.mxu0 %v1284
      %1302 = vmatpush.bf16.msra.mxu0 %v1283
      %1303 = vmatpush.bf16.msra.mxu0 %v1282
      %1304 = vmatpush.bf16.msra.mxu0 %v1281
      %1305 = vmatmul.bf16.gmra.mxu0 %v1225
      %v1306 = vpop.f32.mrf.mxu0
      %v1307 = vadd.f32 0.0, %v1306
      %v1308 = vpop.f32.mrf.mxu0
      %1309 = vdwg.mxu0
      %v1310 = vadd.f32 %v1232, %v1307
      %1311 = vst [vmem:[#allocation2] sm:$0xff] %v1310
      %v1312 = vld [vmem:[#allocation2] sm:$0xff]
      %s1313 = scalar_lea.vmem %s246, 64
      %v1314 = vld [vmem:[%s1313] sm:$0xf]
      %v1315 = vld [vmem:[%s1313 + $0x4] sm:$0xf]
      %v1316 = vld [vmem:[%s1313 + $0x8] sm:$0xf]
      %v1317 = vld [vmem:[%s1313 + $0xc] sm:$0xf]
      %v1318 = vld [vmem:[%s1313 + $0x10] sm:$0xf]
      %v1319 = vld [vmem:[%s1313 + $0x14] sm:$0xf]
      %v1320 = vld [vmem:[%s1313 + $0x18] sm:$0xf]
      %v1321 = vld [vmem:[%s1313 + $0x1c] sm:$0xf]
      %v1322 = vld [vmem:[%s1313 + $0x20] sm:$0xf]
      %v1323 = vld [vmem:[%s1313 + $0x24] sm:$0xf]
      %v1324 = vld [vmem:[%s1313 + $0x28] sm:$0xf]
      %v1325 = vld [vmem:[%s1313 + $0x2c] sm:$0xf]
      %v1326 = vld [vmem:[%s1313 + $0x30] sm:$0xf]
      %v1327 = vld [vmem:[%s1313 + $0x34] sm:$0xf]
      %v1328 = vld [vmem:[%s1313 + $0x38] sm:$0xf]
      %v1329 = vld [vmem:[%s1313 + $0x3c] sm:$0xf]
      %v1346 = vunpack.c.l.b16 %v1314
      %v1347 = vunpack.c.l.b16 %v1315
      %v1348 = vunpack.c.l.b16 %v1316
      %v1349 = vunpack.c.l.b16 %v1317
      %v1350 = vunpack.c.l.b16 %v1318
      %v1351 = vunpack.c.l.b16 %v1319
      %v1352 = vunpack.c.l.b16 %v1320
      %v1353 = vunpack.c.l.b16 %v1321
      %v1354 = vunpack.c.l.b16 %v1322
      %v1355 = vunpack.c.l.b16 %v1323
      %v1356 = vunpack.c.l.b16 %v1324
      %v1357 = vunpack.c.l.b16 %v1325
      %v1358 = vunpack.c.l.b16 %v1326
      %v1359 = vunpack.c.l.b16 %v1327
      %v1360 = vunpack.c.l.b16 %v1328
      %v1361 = vunpack.c.l.b16 %v1329
      %v1362 = vpack.c.b16 %v1347, %v1346
      %v1363 = vpack.c.b16 %v1349, %v1348
      %v1364 = vpack.c.b16 %v1351, %v1350
      %v1365 = vpack.c.b16 %v1353, %v1352
      %v1366 = vpack.c.b16 %v1355, %v1354
      %v1367 = vpack.c.b16 %v1357, %v1356
      %v1368 = vpack.c.b16 %v1359, %v1358
      %v1369 = vpack.c.b16 %v1361, %v1360
      %1378 = vmatpush.bf16.msra.mxu0 %v1369
      %1379 = vmatpush.bf16.msra.mxu0 %v1368
      %1380 = vmatpush.bf16.msra.mxu0 %v1367
      %1381 = vmatpush.bf16.msra.mxu0 %v1366
      %1382 = vmatpush.bf16.msra.mxu0 %v1365
      %1383 = vmatpush.bf16.msra.mxu0 %v1364
      %1384 = vmatpush.bf16.msra.mxu0 %v1363
      %1385 = vmatpush.bf16.msra.mxu0 %v1362
      %1386 = vmatmul.bf16.gmra.mxu0 %v1226
      %v1387 = vpop.f32.mrf.mxu0
      %v1388 = vadd.f32 0.0, %v1387
      %v1389 = vpop.f32.mrf.mxu0
      %1390 = vdwg.mxu0
      %v1391 = vadd.f32 %v1312, %v1388
      %1392 = vst [vmem:[#allocation2] sm:$0xff] %v1391
      %v1393 = vld [vmem:[#allocation2] sm:$0xff]
      %s1394 = scalar_lea.vmem %s246, 128
      %v1395 = vld [vmem:[%s1394] sm:$0xf]
      %v1396 = vld [vmem:[%s1394 + $0x4] sm:$0xf]
      %v1397 = vld [vmem:[%s1394 + $0x8] sm:$0xf]
      %v1398 = vld [vmem:[%s1394 + $0xc] sm:$0xf]
      %v1399 = vld [vmem:[%s1394 + $0x10] sm:$0xf]
      %v1400 = vld [vmem:[%s1394 + $0x14] sm:$0xf]
      %v1401 = vld [vmem:[%s1394 + $0x18] sm:$0xf]
      %v1402 = vld [vmem:[%s1394 + $0x1c] sm:$0xf]
      %v1403 = vld [vmem:[%s1394 + $0x20] sm:$0xf]
      %v1404 = vld [vmem:[%s1394 + $0x24] sm:$0xf]
      %v1405 = vld [vmem:[%s1394 + $0x28] sm:$0xf]
      %v1406 = vld [vmem:[%s1394 + $0x2c] sm:$0xf]
      %v1407 = vld [vmem:[%s1394 + $0x30] sm:$0xf]
      %v1408 = vld [vmem:[%s1394 + $0x34] sm:$0xf]
      %v1409 = vld [vmem:[%s1394 + $0x38] sm:$0xf]
      %v1410 = vld [vmem:[%s1394 + $0x3c] sm:$0xf]
      %v1427 = vunpack.c.l.b16 %v1395
      %v1428 = vunpack.c.l.b16 %v1396
      %v1429 = vunpack.c.l.b16 %v1397
      %v1430 = vunpack.c.l.b16 %v1398
      %v1431 = vunpack.c.l.b16 %v1399
      %v1432 = vunpack.c.l.b16 %v1400
      %v1433 = vunpack.c.l.b16 %v1401
      %v1434 = vunpack.c.l.b16 %v1402
      %v1435 = vunpack.c.l.b16 %v1403
      %v1436 = vunpack.c.l.b16 %v1404
      %v1437 = vunpack.c.l.b16 %v1405
      %v1438 = vunpack.c.l.b16 %v1406
      %v1439 = vunpack.c.l.b16 %v1407
      %v1440 = vunpack.c.l.b16 %v1408
      %v1441 = vunpack.c.l.b16 %v1409
      %v1442 = vunpack.c.l.b16 %v1410
      %v1443 = vpack.c.b16 %v1428, %v1427
      %v1444 = vpack.c.b16 %v1430, %v1429
      %v1445 = vpack.c.b16 %v1432, %v1431
      %v1446 = vpack.c.b16 %v1434, %v1433
      %v1447 = vpack.c.b16 %v1436, %v1435
      %v1448 = vpack.c.b16 %v1438, %v1437
      %v1449 = vpack.c.b16 %v1440, %v1439
      %v1450 = vpack.c.b16 %v1442, %v1441
      %1459 = vmatpush.bf16.msra.mxu0 %v1450
      %1460 = vmatpush.bf16.msra.mxu0 %v1449
      %1461 = vmatpush.bf16.msra.mxu0 %v1448
      %1462 = vmatpush.bf16.msra.mxu0 %v1447
      %1463 = vmatpush.bf16.msra.mxu0 %v1446
      %1464 = vmatpush.bf16.msra.mxu0 %v1445
      %1465 = vmatpush.bf16.msra.mxu0 %v1444
      %1466 = vmatpush.bf16.msra.mxu0 %v1443
      %1467 = vmatmul.bf16.gmra.mxu0 %v1227
      %v1468 = vpop.f32.mrf.mxu0
      %v1469 = vadd.f32 0.0, %v1468
      %v1470 = vpop.f32.mrf.mxu0
      %1471 = vdwg.mxu0
      %v1472 = vadd.f32 %v1393, %v1469
      %1473 = vst [vmem:[#allocation2] sm:$0xff] %v1472
      %v1474 = vld [vmem:[#allocation2] sm:$0xff]
      %s1475 = scalar_lea.vmem %s246, 192
      %v1476 = vld [vmem:[%s1475] sm:$0xf]
      %v1477 = vld [vmem:[%s1475 + $0x4] sm:$0xf]
      %v1478 = vld [vmem:[%s1475 + $0x8] sm:$0xf]
      %v1479 = vld [vmem:[%s1475 + $0xc] sm:$0xf]
      %v1480 = vld [vmem:[%s1475 + $0x10] sm:$0xf]
      %v1481 = vld [vmem:[%s1475 + $0x14] sm:$0xf]
      %v1482 = vld [vmem:[%s1475 + $0x18] sm:$0xf]
      %v1483 = vld [vmem:[%s1475 + $0x1c] sm:$0xf]
      %v1484 = vld [vmem:[%s1475 + $0x20] sm:$0xf]
      %v1485 = vld [vmem:[%s1475 + $0x24] sm:$0xf]
      %v1486 = vld [vmem:[%s1475 + $0x28] sm:$0xf]
      %v1487 = vld [vmem:[%s1475 + $0x2c] sm:$0xf]
      %v1488 = vld [vmem:[%s1475 + $0x30] sm:$0xf]
      %v1489 = vld [vmem:[%s1475 + $0x34] sm:$0xf]
      %v1490 = vld [vmem:[%s1475 + $0x38] sm:$0xf]
      %v1491 = vld [vmem:[%s1475 + $0x3c] sm:$0xf]
      %v1508 = vunpack.c.l.b16 %v1476
      %v1509 = vunpack.c.l.b16 %v1477
      %v1510 = vunpack.c.l.b16 %v1478
      %v1511 = vunpack.c.l.b16 %v1479
      %v1512 = vunpack.c.l.b16 %v1480
      %v1513 = vunpack.c.l.b16 %v1481
      %v1514 = vunpack.c.l.b16 %v1482
      %v1515 = vunpack.c.l.b16 %v1483
      %v1516 = vunpack.c.l.b16 %v1484
      %v1517 = vunpack.c.l.b16 %v1485
      %v1518 = vunpack.c.l.b16 %v1486
      %v1519 = vunpack.c.l.b16 %v1487
      %v1520 = vunpack.c.l.b16 %v1488
      %v1521 = vunpack.c.l.b16 %v1489
      %v1522 = vunpack.c.l.b16 %v1490
      %v1523 = vunpack.c.l.b16 %v1491
      %v1524 = vpack.c.b16 %v1509, %v1508
      %v1525 = vpack.c.b16 %v1511, %v1510
      %v1526 = vpack.c.b16 %v1513, %v1512
      %v1527 = vpack.c.b16 %v1515, %v1514
      %v1528 = vpack.c.b16 %v1517, %v1516
      %v1529 = vpack.c.b16 %v1519, %v1518
      %v1530 = vpack.c.b16 %v1521, %v1520
      %v1531 = vpack.c.b16 %v1523, %v1522
      %1540 = vmatpush.bf16.msra.mxu0 %v1531
      %1541 = vmatpush.bf16.msra.mxu0 %v1530
      %1542 = vmatpush.bf16.msra.mxu0 %v1529
      %1543 = vmatpush.bf16.msra.mxu0 %v1528
      %1544 = vmatpush.bf16.msra.mxu0 %v1527
      %1545 = vmatpush.bf16.msra.mxu0 %v1526
      %1546 = vmatpush.bf16.msra.mxu0 %v1525
      %1547 = vmatpush.bf16.msra.mxu0 %v1524
      %1548 = vmatmul.bf16.gmra.mxu0 %v1228
      %v1549 = vpop.f32.mrf.mxu0
      %v1550 = vadd.f32 0.0, %v1549
      %v1551 = vpop.f32.mrf.mxu0
      %1552 = vdwg.mxu0
      %v1553 = vadd.f32 %v1474, %v1550
      %1554 = vst [vmem:[#allocation2] sm:$0xff] %v1553
      %v1555 = vld [vmem:[#allocation2] sm:$0xff]
      %s1556 = scalar_lea.vmem %s246, 256
      %v1557 = vld [vmem:[%s1556] sm:$0xf]
      %v1558 = vld [vmem:[%s1556 + $0x4] sm:$0xf]
      %v1559 = vld [vmem:[%s1556 + $0x8] sm:$0xf]
      %v1560 = vld [vmem:[%s1556 + $0xc] sm:$0xf]
      %v1561 = vld [vmem:[%s1556 + $0x10] sm:$0xf]
      %v1562 = vld [vmem:[%s1556 + $0x14] sm:$0xf]
      %v1563 = vld [vmem:[%s1556 + $0x18] sm:$0xf]
      %v1564 = vld [vmem:[%s1556 + $0x1c] sm:$0xf]
      %v1565 = vld [vmem:[%s1556 + $0x20] sm:$0xf]
      %v1566 = vld [vmem:[%s1556 + $0x24] sm:$0xf]
      %v1567 = vld [vmem:[%s1556 + $0x28] sm:$0xf]
      %v1568 = vld [vmem:[%s1556 + $0x2c] sm:$0xf]
      %v1569 = vld [vmem:[%s1556 + $0x30] sm:$0xf]
      %v1570 = vld [vmem:[%s1556 + $0x34] sm:$0xf]
      %v1571 = vld [vmem:[%s1556 + $0x38] sm:$0xf]
      %v1572 = vld [vmem:[%s1556 + $0x3c] sm:$0xf]
      %v1589 = vunpack.c.l.b16 %v1557
      %v1590 = vunpack.c.l.b16 %v1558
      %v1591 = vunpack.c.l.b16 %v1559
      %v1592 = vunpack.c.l.b16 %v1560
      %v1593 = vunpack.c.l.b16 %v1561
      %v1594 = vunpack.c.l.b16 %v1562
      %v1595 = vunpack.c.l.b16 %v1563
      %v1596 = vunpack.c.l.b16 %v1564
      %v1597 = vunpack.c.l.b16 %v1565
      %v1598 = vunpack.c.l.b16 %v1566
      %v1599 = vunpack.c.l.b16 %v1567
      %v1600 = vunpack.c.l.b16 %v1568
      %v1601 = vunpack.c.l.b16 %v1569
      %v1602 = vunpack.c.l.b16 %v1570
      %v1603 = vunpack.c.l.b16 %v1571
      %v1604 = vunpack.c.l.b16 %v1572
      %v1605 = vpack.c.b16 %v1590, %v1589
      %v1606 = vpack.c.b16 %v1592, %v1591
      %v1607 = vpack.c.b16 %v1594, %v1593
      %v1608 = vpack.c.b16 %v1596, %v1595
      %v1609 = vpack.c.b16 %v1598, %v1597
      %v1610 = vpack.c.b16 %v1600, %v1599
      %v1611 = vpack.c.b16 %v1602, %v1601
      %v1612 = vpack.c.b16 %v1604, %v1603
      %1621 = vmatpush.bf16.msra.mxu0 %v1612
      %1622 = vmatpush.bf16.msra.mxu0 %v1611
      %1623 = vmatpush.bf16.msra.mxu0 %v1610
      %1624 = vmatpush.bf16.msra.mxu0 %v1609
      %1625 = vmatpush.bf16.msra.mxu0 %v1608
      %1626 = vmatpush.bf16.msra.mxu0 %v1607
      %1627 = vmatpush.bf16.msra.mxu0 %v1606
      %1628 = vmatpush.bf16.msra.mxu0 %v1605
      %1629 = vmatmul.bf16.gmra.mxu0 %v1229
      %v1630 = vpop.f32.mrf.mxu0
      %v1631 = vadd.f32 0.0, %v1630
      %v1632 = vpop.f32.mrf.mxu0
      %1633 = vdwg.mxu0
      %v1634 = vadd.f32 %v1555, %v1631
      %1635 = vst [vmem:[#allocation2] sm:$0xff] %v1634
      %v1636 = vld [vmem:[#allocation2] sm:$0xff]
      %s1637 = scalar_lea.vmem %s246, 320
      %v1638 = vld [vmem:[%s1637] sm:$0xf]
      %v1639 = vld [vmem:[%s1637 + $0x4] sm:$0xf]
      %v1640 = vld [vmem:[%s1637 + $0x8] sm:$0xf]
      %v1641 = vld [vmem:[%s1637 + $0xc] sm:$0xf]
      %v1642 = vld [vmem:[%s1637 + $0x10] sm:$0xf]
      %v1643 = vld [vmem:[%s1637 + $0x14] sm:$0xf]
      %v1644 = vld [vmem:[%s1637 + $0x18] sm:$0xf]
      %v1645 = vld [vmem:[%s1637 + $0x1c] sm:$0xf]
      %v1646 = vld [vmem:[%s1637 + $0x20] sm:$0xf]
      %v1647 = vld [vmem:[%s1637 + $0x24] sm:$0xf]
      %v1648 = vld [vmem:[%s1637 + $0x28] sm:$0xf]
      %v1649 = vld [vmem:[%s1637 + $0x2c] sm:$0xf]
      %v1650 = vld [vmem:[%s1637 + $0x30] sm:$0xf]
      %v1651 = vld [vmem:[%s1637 + $0x34] sm:$0xf]
      %v1652 = vld [vmem:[%s1637 + $0x38] sm:$0xf]
      %v1653 = vld [vmem:[%s1637 + $0x3c] sm:$0xf]
      %v1670 = vunpack.c.l.b16 %v1638
      %v1671 = vunpack.c.l.b16 %v1639
      %v1672 = vunpack.c.l.b16 %v1640
      %v1673 = vunpack.c.l.b16 %v1641
      %v1674 = vunpack.c.l.b16 %v1642
      %v1675 = vunpack.c.l.b16 %v1643
      %v1676 = vunpack.c.l.b16 %v1644
      %v1677 = vunpack.c.l.b16 %v1645
      %v1678 = vunpack.c.l.b16 %v1646
      %v1679 = vunpack.c.l.b16 %v1647
      %v1680 = vunpack.c.l.b16 %v1648
      %v1681 = vunpack.c.l.b16 %v1649
      %v1682 = vunpack.c.l.b16 %v1650
      %v1683 = vunpack.c.l.b16 %v1651
      %v1684 = vunpack.c.l.b16 %v1652
      %v1685 = vunpack.c.l.b16 %v1653
      %v1686 = vpack.c.b16 %v1671, %v1670
      %v1687 = vpack.c.b16 %v1673, %v1672
      %v1688 = vpack.c.b16 %v1675, %v1674
      %v1689 = vpack.c.b16 %v1677, %v1676
      %v1690 = vpack.c.b16 %v1679, %v1678
      %v1691 = vpack.c.b16 %v1681, %v1680
      %v1692 = vpack.c.b16 %v1683, %v1682
      %v1693 = vpack.c.b16 %v1685, %v1684
      %1702 = vmatpush.bf16.msra.mxu0 %v1693
      %1703 = vmatpush.bf16.msra.mxu0 %v1692
      %1704 = vmatpush.bf16.msra.mxu0 %v1691
      %1705 = vmatpush.bf16.msra.mxu0 %v1690
      %1706 = vmatpush.bf16.msra.mxu0 %v1689
      %1707 = vmatpush.bf16.msra.mxu0 %v1688
      %1708 = vmatpush.bf16.msra.mxu0 %v1687
      %1709 = vmatpush.bf16.msra.mxu0 %v1686
      %1710 = vmatmul.bf16.gmra.mxu0 %v1230
      %v1711 = vpop.f32.mrf.mxu0
      %v1712 = vadd.f32 0.0, %v1711
      %v1713 = vpop.f32.mrf.mxu0
      %1714 = vdwg.mxu0
      %v1715 = vadd.f32 %v1636, %v1712
      %1716 = vst [vmem:[#allocation2] sm:$0xff] %v1715
      %v1717 = vld [vmem:[#allocation2] sm:$0xff]
      %s1718 = scalar_lea.vmem %s246, 384
      %v1719 = vld [vmem:[%s1718] sm:$0xf]
      %v1720 = vld [vmem:[%s1718 + $0x4] sm:$0xf]
      %v1721 = vld [vmem:[%s1718 + $0x8] sm:$0xf]
      %v1722 = vld [vmem:[%s1718 + $0xc] sm:$0xf]
      %v1723 = vld [vmem:[%s1718 + $0x10] sm:$0xf]
      %v1724 = vld [vmem:[%s1718 + $0x14] sm:$0xf]
      %v1725 = vld [vmem:[%s1718 + $0x18] sm:$0xf]
      %v1726 = vld [vmem:[%s1718 + $0x1c] sm:$0xf]
      %v1727 = vld [vmem:[%s1718 + $0x20] sm:$0xf]
      %v1728 = vld [vmem:[%s1718 + $0x24] sm:$0xf]
      %v1729 = vld [vmem:[%s1718 + $0x28] sm:$0xf]
      %v1730 = vld [vmem:[%s1718 + $0x2c] sm:$0xf]
      %v1731 = vld [vmem:[%s1718 + $0x30] sm:$0xf]
      %v1732 = vld [vmem:[%s1718 + $0x34] sm:$0xf]
      %v1733 = vld [vmem:[%s1718 + $0x38] sm:$0xf]
      %v1734 = vld [vmem:[%s1718 + $0x3c] sm:$0xf]
      %v1751 = vunpack.c.l.b16 %v1719
      %v1752 = vunpack.c.l.b16 %v1720
      %v1753 = vunpack.c.l.b16 %v1721
      %v1754 = vunpack.c.l.b16 %v1722
      %v1755 = vunpack.c.l.b16 %v1723
      %v1756 = vunpack.c.l.b16 %v1724
      %v1757 = vunpack.c.l.b16 %v1725
      %v1758 = vunpack.c.l.b16 %v1726
      %v1759 = vunpack.c.l.b16 %v1727
      %v1760 = vunpack.c.l.b16 %v1728
      %v1761 = vunpack.c.l.b16 %v1729
      %v1762 = vunpack.c.l.b16 %v1730
      %v1763 = vunpack.c.l.b16 %v1731
      %v1764 = vunpack.c.l.b16 %v1732
      %v1765 = vunpack.c.l.b16 %v1733
      %v1766 = vunpack.c.l.b16 %v1734
      %v1767 = vpack.c.b16 %v1752, %v1751
      %v1768 = vpack.c.b16 %v1754, %v1753
      %v1769 = vpack.c.b16 %v1756, %v1755
      %v1770 = vpack.c.b16 %v1758, %v1757
      %v1771 = vpack.c.b16 %v1760, %v1759
      %v1772 = vpack.c.b16 %v1762, %v1761
      %v1773 = vpack.c.b16 %v1764, %v1763
      %v1774 = vpack.c.b16 %v1766, %v1765
      %1783 = vmatpush.bf16.msra.mxu0 %v1774
      %1784 = vmatpush.bf16.msra.mxu0 %v1773
      %1785 = vmatpush.bf16.msra.mxu0 %v1772
      %1786 = vmatpush.bf16.msra.mxu0 %v1771
      %1787 = vmatpush.bf16.msra.mxu0 %v1770
      %1788 = vmatpush.bf16.msra.mxu0 %v1769
      %1789 = vmatpush.bf16.msra.mxu0 %v1768
      %1790 = vmatpush.bf16.msra.mxu0 %v1767
      %1791 = vmatmul.bf16.gmra.mxu0 %v1231
      %v1792 = vpop.f32.mrf.mxu0
      %v1793 = vadd.f32 0.0, %v1792
      %v1794 = vpop.f32.mrf.mxu0
      %1795 = vdwg.mxu0
      %v1796 = vadd.f32 %v1717, %v1793
      %1797 = vst [vmem:[#allocation2] sm:$0xff] %v1796
      %p1798 = scmp.eq.s32.totalorder %s20, 6
      // Predicated region
      $region41: #{_forward.3} parent=35 // pred_check
        %p1799 = pneg %p1798
      $region42: #{_forward.3} parent=35 // pred_check_branch
        %1801 = sbr.rel (%p1799) target = $region44
      $region43: #{_forward.3} parent=35 // pred_region
        %v1802 = vld [vmem:[#allocation2] sm:$0xff]
        %v1803 = vld [vmem:[%s3] sm:$0x1]
        %v1805 = vperm.slane %v1803, 0
        %v1807 = vadd.f32 %v1802, %v1805
        %1808 = vst [vmem:[%s251] sm:$0xff] %v1807
      $region44: #{_forward.3} parent=35 // pred_fallthru
        _
      %p1809 = scmp.lt.s32.totalorder %s19, 0
      %s1810 = scalar_select %p1809, %s19, 0
      %s1811 = smul.addr %s1810, 8
      %s1812 = scalar_lea.vmem %s4, %s1811
      // Predicated region
      $region45: #{_forward.3} parent=35 // pred_check
        %p1813 = pneg %p141
      $region46: #{_forward.3} parent=35 // pred_check_branch
        %1815 = sbr.rel (%p1813) target = $region48
      $region47: #{_forward.3} parent=35 // pred_region
        _
      $region48: #{_forward.3} parent=35 // pred_fallthru
        _
      // Predicated region
      $region49: #{_forward.3} parent=35 // pred_check
        %p1816 = pneg %p141
      $region50: #{_forward.3} parent=35 // pred_check_branch
        %1818 = sbr.rel (%p1816) target = $region52
      $region51: #{_forward.3} parent=35 // pred_region
        %p1819 = scmp.lt.s32.totalorder %s19, 0
        %s1820 = scalar_select %p1819, %s19, 0
        %s1821 = smul.addr %s1820, 8
        %s1822 = scalar_lea.vmem %s4, %s1821
      $region52: #{_forward.3} parent=35 // pred_fallthru
        _
    $region36: #{_forward.3} parent=5 // pred_fallthru
      _
    %p1823 = scmp.le.s32.totalorder 2, %s10
    // Predicated region
    $region53: #{_forward.3} parent=5 // pred_check
      %p1824 = pneg %p1823
    $region54: #{_forward.3} parent=5 // pred_check_branch
      %1826 = sbr.rel (%p1824) target = $region56
    $region55: #{_forward.3} parent=5 // pred_region
      %s1827 = ssub.s32 %s10, 2
    $region56: #{_forward.3} parent=5 // pred_fallthru
      _
  $region6: #{_forward.3} parent=0 // loop_footer
    %s14 = sadd.s32 1, %s10
  $region7: #{_forward.3} parent=0 // loop_footer_branch
    %9 = sbr.rel target = $region3
  $region8: #{_forward.3} parent=0 // loop_exit
    _

</llo_original>
